<compile_context>
chip_gen: v6e
topology: v6e:2x2x1
jax: 0.10.0
libtpu: 0.0.40
codegen_flags: <defaults>
</compile_context>

<pallas_src>
import jax
import jax.numpy as jnp
from jax.experimental import pallas as pl
from jax.experimental.pallas import tpu as pltpu

LANES = 128
# Row-compacted slab heights (contraction dims padded to sublane multiples).
K1 = 8      # l1:         4 real contraction rows
K2 = 32     # l2:         25 real contraction rows
K3 = 64     # fused heads: 50 real contraction rows (actor_lin1 + l3)
K4 = 32     # critic:     rows 2..26 real (aligned with l3's output lanes)
W1_OFF = 0
W2_OFF = W1_OFF + K1          # 8
WH_OFF = W2_OFF + K2          # 40
WC_OFF = WH_OFF + K3          # 104
B_OFF = WC_OFF + K4           # 136  (one 8-row bias tile)
P_ROWS = B_OFF + 8            # 144  -> 144*128*4 B ~= 72 KiB (was 260 KiB)

_FLOPS_PER_ROW = 2 * LANES * (K1 + K2 + K3 + K4)


def _dot(a, b):
    # Pin f32 MXU precision; extra passes are fully hidden at these shapes.
    return jnp.dot(a, b, precision=jax.lax.Precision.HIGHEST,
                   preferred_element_type=jnp.float32)


def _forward_block(x, p_ref):
    """x: (B, 4) f32 value -> (B, 128) slab: lanes 0-1 actor log-softmax, lane 2 critic."""
    # F.normalize(x, dim=0): per-column L2 norm over the batch axis (eps clamp 1e-12).
    col_norm = jnp.sqrt(jnp.sum(x * x, axis=0, keepdims=True))
    xn = x / jnp.maximum(col_norm, 1e-12)

    # Biases live in one 8-sublane tile; load once, slice in registers.
    bias = p_ref[B_OFF:B_OFF + 8, :]
    b1 = bias[0:1, :]
    b2 = bias[1:2, :]
    bh = bias[2:3, :]
    bc = bias[3:4, :]

    # y = relu(l1(x)) : (B, 4) @ (4, 128).  Mosaic zero-pads the K dim for the MXU.
    w1 = p_ref[W1_OFF:W1_OFF + 4, :]
    y = jnp.maximum(_dot(xn, w1) + b1, 0.0)           # lanes 0:25 real, rest 0

    # y = relu(l2(y)) : contract only the 32 lanes that can be nonzero.
    w2 = p_ref[W2_OFF:W2_OFF + K2, :]
    y = jnp.maximum(_dot(y[:, :K2], w2) + b2, 0.0)    # lanes 0:50 real, rest 0

    # Fused heads: lanes 0-1 = actor logits, lanes 2-26 = l3 pre-activation, rest 0.
    wh = p_ref[WH_OFF:WH_OFF + K3, :]
    h = _dot(y[:, :K3], wh) + bh

    # actor = log_softmax(h, dim=0): lane-parallel over the batch axis.  Padded
    # lanes are all-zero so the shift/exp stays finite; they're never read.
    h_max = jnp.max(h, axis=0, keepdims=True)
    h_shift = h - h_max
    lse = jnp.log(jnp.sum(jnp.exp(h_shift), axis=0, keepdims=True))
    actor_ls = h_shift - lse

    # c = relu(l3(y)); critic = tanh(critic_lin1(c)).  WC rows 0-1 are zero so
    # the relu'd actor lanes can never leak into the critic; result -> lane 2.
    c = jnp.maximum(h, 0.0)
    wc = p_ref[WC_OFF:WC_OFF + K4, :]
    critic = jnp.tanh(_dot(c[:, :K4], wc) + bc)

    # Single lane-dense output slab: lanes 0-1 actor, lane 2 critic.
    lane = jax.lax.broadcasted_iota(jnp.int32, h.shape, 1)
    return jnp.where(lane < 2, actor_ls, critic)


def actor_critic_kernel(x_ref, p_ref, out_ref):
    out_ref[...] = _forward_block(x_ref[...], p_ref)


def actor_critic_rollout_kernel(x_ref, p_ref, out_ref):
    # x_ref: (1, B, 4) block for this timestep; params block is VMEM-resident
    # across all grid steps (constant index_map).
    out_ref[0] = _forward_block(x_ref[0], p_ref)


def pack_params(params):
    """Pack the 10 PyTorch-layout tensors into one row-compacted (144, 128) buffer."""
    w1, b1, w2, b2, wa, ba, w3, b3, wc, bc = params
    P = jnp.zeros((P_ROWS, LANES), jnp.float32)
    # l1: (4, 25)
    P = P.at[W1_OFF:W1_OFF + 4, 0:25].set(w1)
    # l2: (25, 50)
    P = P.at[W2_OFF:W2_OFF + 25, 0:50].set(w2)
    # fused heads: actor_lin1 (50, 2) -> lanes 0-1, l3 (50, 25) -> lanes 2-26
    P = P.at[WH_OFF:WH_OFF + 50, 0:2].set(wa)
    P = P.at[WH_OFF:WH_OFF + 50, 2:27].set(w3)
    # critic_lin1 (25, 1): rows aligned with l3's lanes (2-26), output -> lane 2
    P = P.at[WC_OFF + 2:WC_OFF + 27, 2:3].set(wc)
    # biases, one row each
    P = P.at[B_OFF + 0, 0:25].set(b1[0])
    P = P.at[B_OFF + 1, 0:50].set(b2[0])
    P = P.at[B_OFF + 2, 0:2].set(ba[0])
    P = P.at[B_OFF + 2, 2:27].set(b3[0])
    P = P.at[B_OFF + 3, 2:3].set(bc[0])
    return P


@jax.jit
def actor_critic_forward(x, packed_params):
    """Single forward.  x: (B, 4) float32; packed_params: (144, 128)."""
    B = x.shape[0]
    vmem = pl.BlockSpec(memory_space=pltpu.MemorySpace.VMEM)
    out = pl.pallas_call(
        actor_critic_kernel,
        out_shape=jax.ShapeDtypeStruct((B, LANES), jnp.float32),
        in_specs=[vmem, vmem],
        out_specs=vmem,
        cost_estimate=pl.CostEstimate(
            flops=B * _FLOPS_PER_ROW,
            transcendentals=3 * B * LANES,
            bytes_accessed=(P_ROWS * LANES + B * 4 + B * LANES) * 4),
    )(x.astype(jnp.float32), packed_params)
    return out[:, 0:2], out[:, 2:3]


@jax.jit
def actor_critic_rollout(xs, packed_params):
    """Batched rollout: xs (T, B, 4) of independent forward calls.

    Weights use a constant index_map so the 72 KiB block is DMA'd once and stays
    resident across the T grid steps; the step axis is 'parallel' so v7x uses
    both TensorCores (no effect on the single-core v5e/v6e).
    """
    T, B, _ = xs.shape
    out = pl.pallas_call(
        actor_critic_rollout_kernel,
        out_shape=jax.ShapeDtypeStruct((T, B, LANES), jnp.float32),
        grid=(T,),
        in_specs=[
            pl.BlockSpec((1, B, 4), lambda t: (t, 0, 0)),
            pl.BlockSpec((P_ROWS, LANES), lambda t: (0, 0)),   # resident weights
        ],
        out_specs=pl.BlockSpec((1, B, LANES), lambda t: (t, 0, 0)),
        compiler_params=pltpu.CompilerParams(
            dimension_semantics=("parallel",)),
        cost_estimate=pl.CostEstimate(
            flops=T * B * _FLOPS_PER_ROW,
            transcendentals=3 * T * B * LANES,
            bytes_accessed=(P_ROWS * LANES + T * B * 4 + T * B * LANES) * 4),
    )(xs.astype(jnp.float32), packed_params)
    return out[:, :, 0:2], out[:, :, 2:3]


def init_linear(key, fan_in, fan_out):
    """Deterministic PyTorch-style init; weight returned pre-transposed (in, out)."""
    kw, kb = jax.random.split(key)
    bound = 1.0 / (fan_in ** 0.5)
    w = jax.random.uniform(kw, (fan_in, fan_out), jnp.float32, -bound, bound)
    b = jax.random.uniform(kb, (1, fan_out), jnp.float32, -bound, bound)
    return w, b


def init_params(key):
    k1, k2, k3, k4, k5 = jax.random.split(key, 5)
    w1, b1 = init_linear(k1, 4, 25)     # l1
    w2, b2 = init_linear(k2, 25, 50)    # l2
    wa, ba = init_linear(k3, 50, 2)     # actor_lin1
    w3, b3 = init_linear(k4, 50, 25)    # l3
    wc, bc = init_linear(k5, 25, 1)     # critic_lin1
    return (w1, b1, w2, b2, wa, ba, w3, b3, wc, bc)


def reference_forward(x, params):
    """Pure-JAX reference matching the PyTorch forward (true-f32 matmuls)."""
    w1, b1, w2, b2, wa, ba, w3, b3, wc, bc = params
    dot = lambda a, b: jnp.dot(a, b, precision=jax.lax.Precision.HIGHEST)
    xn = x / jnp.maximum(jnp.linalg.norm(x, axis=0, keepdims=True), 1e-12)
    y = jax.nn.relu(dot(xn, w1) + b1)
    y = jax.nn.relu(dot(y, w2) + b2)
    actor = jax.nn.log_softmax(dot(y, wa) + ba, axis=0)
    c = jax.nn.relu(dot(y, w3) + b3)
    critic = jnp.tanh(dot(c, wc) + bc)
    return actor, critic


if __name__ == "__main__":
    key = jax.random.PRNGKey(0)
    kx, kp, kr = jax.random.split(key, 3)

    B = 2
    x = jax.random.normal(kx, (B, 4), jnp.float32)   # (batch, state_dim=4)
    params = init_params(kp)
    packed = pack_params(params)

    # Single-call path.
    actor, critic = actor_critic_forward(x, packed)
    jax.block_until_ready((actor, critic))
    ref_actor, ref_critic = reference_forward(x, params)
    assert actor.shape == (B, 2) and critic.shape == (B, 1)
    assert jnp.allclose(actor, ref_actor, atol=1e-5, rtol=1e-5)
    assert jnp.allclose(critic, ref_critic, atol=1e-5, rtol=1e-5)

    # Rollout path: T independent forwards, weights DMA'd once and kept resident.
    T = 4
    xs = jax.random.normal(kr, (T, B, 4), jnp.float32)
    r_actor, r_critic = actor_critic_rollout(xs, packed)
    jax.block_until_ready((r_actor, r_critic))
    v_actor, v_critic = jax.vmap(reference_forward, in_axes=(0, None))(xs, params)
    assert r_actor.shape == (T, B, 2) and r_critic.shape == (T, B, 1)
    assert jnp.allclose(r_actor, v_actor, atol=1e-5, rtol=1e-5)
    assert jnp.allclose(r_critic, v_critic, atol=1e-5, rtol=1e-5)

    print("KERNEL_OK")
</pallas_src>

<mosaic_0001>
module attributes {stable_mosaic.version = 11 : i64} {
  func.func @actor_critic_kernel(%arg0: memref<2x4xf32, #tpu.memory_space<vmem>>, %arg1: memref<144x128xf32, #tpu.memory_space<vmem>>, %arg2: memref<2x128xf32, #tpu.memory_space<vmem>>) attributes {dimension_semantics = [], scalar_prefetch = 0 : i64, scratch_operands = 0 : i64, tpu.core_type = #tpu.core_type<tc>} {
    %c0 = arith.constant 0 : index
    %c0_0 = arith.constant 0 : index
    %0 = vector.load %arg0[%c0, %c0_0] : memref<2x4xf32, #tpu.memory_space<vmem>>, vector<2x4xf32>
    %1 = arith.mulf %0, %0 : vector<2x4xf32>
    %cst = arith.constant dense<0.000000e+00> : vector<4xf32>
    %2 = vector.multi_reduction <add>, %1, %cst [0] : vector<2x4xf32> to vector<4xf32>
    %3 = vector.shape_cast %2 : vector<4xf32> to vector<1x4xf32>
    %4 = math.sqrt %3 : vector<1x4xf32>
    %cst_1 = arith.constant 9.99999996E-13 : f32
    %5 = vector.broadcast %cst_1 : f32 to vector<1x4xf32>
    %6 = arith.maximumf %4, %5 : vector<1x4xf32>
    %7 = vector.broadcast %6 : vector<1x4xf32> to vector<2x4xf32>
    %8 = arith.divf %0, %7 : vector<2x4xf32>
    %c136 = arith.constant 136 : index
    %c0_2 = arith.constant 0 : index
    %9 = vector.load %arg1[%c136, %c0_2] : memref<144x128xf32, #tpu.memory_space<vmem>>, vector<8x128xf32>
    %10 = vector.extract_strided_slice %9 {offsets = [0, 0], sizes = [1, 128], strides = [1, 1]} : vector<8x128xf32> to vector<1x128xf32>
    %11 = vector.extract_strided_slice %9 {offsets = [1, 0], sizes = [1, 128], strides = [1, 1]} : vector<8x128xf32> to vector<1x128xf32>
    %12 = vector.extract_strided_slice %9 {offsets = [2, 0], sizes = [1, 128], strides = [1, 1]} : vector<8x128xf32> to vector<1x128xf32>
    %13 = vector.extract_strided_slice %9 {offsets = [3, 0], sizes = [1, 128], strides = [1, 1]} : vector<8x128xf32> to vector<1x128xf32>
    %c0_3 = arith.constant 0 : index
    %c0_4 = arith.constant 0 : index
    %14 = vector.load %arg1[%c0_3, %c0_4] : memref<144x128xf32, #tpu.memory_space<vmem>>, vector<4x128xf32>
    %cst_5 = arith.constant dense<0.000000e+00> : vector<2x128xf32>
    %15 = tpu.matmul %8, %14, %cst_5 {dimension_numbers = #tpu.dot_dimension_numbers<[1], [0], [0], [1], [0, 0, 1, 1], [], []>, precision = #tpu.contract_precision<fp32>} : vector<2x4xf32>, vector<4x128xf32>, vector<2x128xf32> -> vector<2x128xf32>
    %16 = vector.broadcast %10 : vector<1x128xf32> to vector<2x128xf32>
    %17 = arith.addf %15, %16 : vector<2x128xf32>
    %cst_6 = arith.constant 0.000000e+00 : f32
    %18 = vector.broadcast %cst_6 : f32 to vector<2x128xf32>
    %19 = arith.maximumf %17, %18 : vector<2x128xf32>
    %c8 = arith.constant 8 : index
    %c0_7 = arith.constant 0 : index
    %20 = vector.load %arg1[%c8, %c0_7] : memref<144x128xf32, #tpu.memory_space<vmem>>, vector<32x128xf32>
    %21 = vector.extract_strided_slice %19 {offsets = [0, 0], sizes = [2, 32], strides = [1, 1]} : vector<2x128xf32> to vector<2x32xf32>
    %cst_8 = arith.constant dense<0.000000e+00> : vector<2x128xf32>
    %22 = tpu.matmul %21, %20, %cst_8 {dimension_numbers = #tpu.dot_dimension_numbers<[1], [0], [0], [1], [0, 0, 1, 1], [], []>, precision = #tpu.contract_precision<fp32>} : vector<2x32xf32>, vector<32x128xf32>, vector<2x128xf32> -> vector<2x128xf32>
    %23 = vector.broadcast %11 : vector<1x128xf32> to vector<2x128xf32>
    %24 = arith.addf %22, %23 : vector<2x128xf32>
    %cst_9 = arith.constant 0.000000e+00 : f32
    %25 = vector.broadcast %cst_9 : f32 to vector<2x128xf32>
    %26 = arith.maximumf %24, %25 : vector<2x128xf32>
    %c40 = arith.constant 40 : index
    %c0_10 = arith.constant 0 : index
    %27 = vector.load %arg1[%c40, %c0_10] : memref<144x128xf32, #tpu.memory_space<vmem>>, vector<64x128xf32>
    %28 = vector.extract_strided_slice %26 {offsets = [0, 0], sizes = [2, 64], strides = [1, 1]} : vector<2x128xf32> to vector<2x64xf32>
    %cst_11 = arith.constant dense<0.000000e+00> : vector<2x128xf32>
    %29 = tpu.matmul %28, %27, %cst_11 {dimension_numbers = #tpu.dot_dimension_numbers<[1], [0], [0], [1], [0, 0, 1, 1], [], []>, precision = #tpu.contract_precision<fp32>} : vector<2x64xf32>, vector<64x128xf32>, vector<2x128xf32> -> vector<2x128xf32>
    %30 = vector.broadcast %12 : vector<1x128xf32> to vector<2x128xf32>
    %31 = arith.addf %29, %30 : vector<2x128xf32>
    %cst_12 = arith.constant dense<0xFF800000> : vector<128xf32>
    %32 = vector.multi_reduction <maximumf>, %31, %cst_12 [0] : vector<2x128xf32> to vector<128xf32>
    %33 = vector.shape_cast %32 : vector<128xf32> to vector<1x128xf32>
    %34 = vector.broadcast %33 : vector<1x128xf32> to vector<2x128xf32>
    %35 = arith.subf %31, %34 : vector<2x128xf32>
    %36 = math.exp %35 : vector<2x128xf32>
    %cst_13 = arith.constant dense<0.000000e+00> : vector<128xf32>
    %37 = vector.multi_reduction <add>, %36, %cst_13 [0] : vector<2x128xf32> to vector<128xf32>
    %38 = vector.shape_cast %37 : vector<128xf32> to vector<1x128xf32>
    %39 = math.log %38 : vector<1x128xf32>
    %40 = vector.broadcast %39 : vector<1x128xf32> to vector<2x128xf32>
    %41 = arith.subf %35, %40 : vector<2x128xf32>
    %cst_14 = arith.constant 0.000000e+00 : f32
    %42 = vector.broadcast %cst_14 : f32 to vector<2x128xf32>
    %43 = arith.maximumf %31, %42 : vector<2x128xf32>
    %c104 = arith.constant 104 : index
    %c0_15 = arith.constant 0 : index
    %44 = vector.load %arg1[%c104, %c0_15] : memref<144x128xf32, #tpu.memory_space<vmem>>, vector<32x128xf32>
    %45 = vector.extract_strided_slice %43 {offsets = [0, 0], sizes = [2, 32], strides = [1, 1]} : vector<2x128xf32> to vector<2x32xf32>
    %cst_16 = arith.constant dense<0.000000e+00> : vector<2x128xf32>
    %46 = tpu.matmul %45, %44, %cst_16 {dimension_numbers = #tpu.dot_dimension_numbers<[1], [0], [0], [1], [0, 0, 1, 1], [], []>, precision = #tpu.contract_precision<fp32>} : vector<2x32xf32>, vector<32x128xf32>, vector<2x128xf32> -> vector<2x128xf32>
    %47 = vector.broadcast %13 : vector<1x128xf32> to vector<2x128xf32>
    %48 = arith.addf %46, %47 : vector<2x128xf32>
    %49 = math.tanh %48 : vector<2x128xf32>
    %50 = tpu.iota {dimensions = array<i32: 1>} : vector<2x128xi32>
    %c2_i32 = arith.constant 2 : i32
    %51 = vector.broadcast %c2_i32 : i32 to vector<2x128xi32>
    %52 = arith.cmpi slt, %50, %51 : vector<2x128xi32>
    %53 = arith.select %52, %41, %49 : vector<2x128xi1>, vector<2x128xf32>
    %c0_17 = arith.constant 0 : index
    %c0_18 = arith.constant 0 : index
    %54 = vector.load %arg2[%c0_17, %c0_18] : memref<2x128xf32, #tpu.memory_space<vmem>>, vector<2x128xf32>
    tpu.vector_store %arg2[%c0_17, %c0_18], %53 {strides = array<i32>} : memref<2x128xf32, #tpu.memory_space<vmem>>, vector<2x128xf32>,
    return
  }
}

</mosaic_0001>

<llo_original>
// kernel: actor_critic_forward.1
$region0: #{actor_critic_forward.1}
  #allocation0 [shape = 'u32[]', space=smem, size = 0x4, offset = 0x4, fixed_abs, tag = 'smem constant byte address 0x4 - core index']
  #allocation1 [shape = 'u32[144,128]{1,0:T(1,128)}', space=vmem, size = 0x12000, scoped, tag = 'internal scratch']
  %s0 = inlined_call_operand.hbm [shape: f32[2,4], index: 0, kind: input, shape index: {}]
  %s1 = inlined_call_operand.hbm [shape: f32[144,128], index: 1, kind: input, shape index: {}]
  %s2 = inlined_call_operand.vmem [shape: f32[2,128], index: 2, kind: output, shape index: {}]
  %s3 = sld [smem:[#allocation0]]
  $region26: #{actor_critic_forward.1} parent=0
    _
  %s5 = ssub.s32 1, %s3
  %s6 = scalar_select 0, %s5, %s3
  $region1: #{actor_critic_forward.1} parent=0
    #allocation2 [shape = 'u8[1024]{0}', space=vmem, size = 0x400, scoped, tag = 'input window, operand 0, single buffered']
    #allocation3 [shape = 's32[1]{0}', space=sflag, size = 0x4, scoped, tag = 'scoped memory for actor_critic_forward.1']
    #allocation4 [shape = 'u8[73728]{0}', space=vmem, size = 0x12000, scoped, tag = 'input window, operand 1, single buffered']
    #allocation5 [shape = 's32[1]{0}', space=sflag, size = 0x4, scoped, tag = 'scoped memory for actor_critic_forward.1']
    %7 = vsyncpa [#allocation3], 0
    %8 = vsyncpa [#allocation5], 0
    // Predicated region
    $region2: #{actor_critic_forward.1} parent=1 // pred_check
      _
    $region3: #{actor_critic_forward.1} parent=1 // pred_check_branch
      %10 = sbr.rel (0) target = $region5
    $region4: #{actor_critic_forward.1} parent=1 // pred_region
      %s12 = ssub.s32 32, 32
      %13 = vsyncadd [#allocation3], %s12
      %s15 = sshll.u32 [#allocation2], 4
      %s16 = int_to_ptr.vmem [resolvable:$true] %s15
      %18 = dma.hbm_to_vmem [thread:$0]  %s0, 32, %s16, [#allocation3]
    $region5: #{actor_critic_forward.1} parent=1 // pred_fallthru
      _
    // Predicated region
    $region6: #{actor_critic_forward.1} parent=1 // pred_check
      _
    $region7: #{actor_critic_forward.1} parent=1 // pred_check_branch
      %20 = sbr.rel (0) target = $region9
    $region8: #{actor_critic_forward.1} parent=1 // pred_region
      %s22 = ssub.s32 2304, 2304
      %23 = vsyncadd [#allocation5], %s22
      %s24 = sshll.u32 [#allocation4], 4
      %s25 = int_to_ptr.vmem [resolvable:$true] %s24
      %30 = dma.hbm_to_vmem [thread:$0]  %s1, 2304, %s25, [#allocation5], 128, 128, 8
    $region9: #{actor_critic_forward.1} parent=1 // pred_fallthru
      _
    // Predicated region
    $region10: #{actor_critic_forward.1} parent=1 // pred_check
      _
    $region11: #{actor_critic_forward.1} parent=1 // pred_check_branch
      %32 = sbr.rel (0) target = $region13
    $region12: #{actor_critic_forward.1} parent=1 // pred_region
      %33 = dma.done [#allocation3], 32
    $region13: #{actor_critic_forward.1} parent=1 // pred_fallthru
      _
    // Predicated region
    $region14: #{actor_critic_forward.1} parent=1 // pred_check
      _
    $region15: #{actor_critic_forward.1} parent=1 // pred_check_branch
      %35 = sbr.rel (0) target = $region17
    $region16: #{actor_critic_forward.1} parent=1 // pred_region
      %36 = dma.done [#allocation5], 2304
    $region17: #{actor_critic_forward.1} parent=1 // pred_fallthru
      _
    %v37 = vld [vmem:[#allocation2] sm:$0x3]
    %v38 = vmul.f32 %v37, %v37
    %vm39 = vcmask 25600
    %v40 = vsel %vm39, %v38, 0.0
    %v41 = vrot.slane %v40, 4
    %v42 = vadd.f32 %v40, %v41
    %v43 = vrot.slane %v42, 2
    %v44 = vadd.f32 %v42, %v43
    %v45 = vrot.slane %v44, 1
    %v46 = vadd.f32 %v44, %v45
    %v47 = vrsqrt.pop %v46
    %v48 = vmul.f32 %v46, %v47
    %vm49 = vcmp.eq.f32.partialorder %v46, inf
    %v50 = vsel %vm49, %v46, %v48
    %vm51 = vcmp.eq.f32.partialorder %v46, 0.0
    %v52 = vand.u32 %v46, 2147483648
    %v53 = vsel %vm51, %v52, %v50
    %v54 = vmax.f32 %v53, 1e-12
    %v55 = vrcp.pop %v54
    %v56 = vmul.f32 %v37, %v55
    %v57 = vld [vmem:[#allocation4 + $0x88] sm:$0xff]
    %v58 = vld [vmem:[#allocation4] sm:$0xf]
    %v59 = vlaneseq
    %v60 = vshrl.u32 %v59, 7
    %v61 = vsub.s32 0, %v60
    %v62 = vrot.slane %v57, %v61
    %vm63 = vcmask 31744
    %v65 = vsel %vm63, %v56, 0
    %vm67 = vcmask 1043456
    %v69 = vsel %vm67, %v58, 0
    %71 = vmatprep.subr.mxu0 0.0
    %72 = vmatpush1.msra.mxu0 0.0
    %73 = vmatprep.subr.mxu0 0.0
    %74 = vmatpush1.msra.mxu0 0.0
    %75 = vmatprep.subr.mxu0 0.0
    %76 = vmatpush1.msra.mxu0 0.0
    %77 = vmatprep.subr.mxu0 0.0
    %78 = vmatpush1.msra.mxu0 0.0
    %79 = vmatprep.subr.mxu0 0.0
    %80 = vmatpush1.msra.mxu0 0.0
    %81 = vmatprep.subr.mxu0 0.0
    %82 = vmatpush1.msra.mxu0 0.0
    %83 = vmatprep.subr.mxu0 0.0
    %84 = vmatpush1.msra.mxu0 0.0
    %85 = vmatprep.subr.mxu0 0.0
    %86 = vmatpush1.msra.mxu0 0.0
    %87 = vmatprep.subr.mxu0 0.0
    %88 = vmatpush1.msra.mxu0 0.0
    %89 = vmatprep.subr.mxu0 0.0
    %90 = vmatpush1.msra.mxu0 0.0
    %91 = vmatprep.subr.mxu0 0.0
    %92 = vmatpush1.msra.mxu0 0.0
    %93 = vmatprep.subr.mxu0 0.0
    %94 = vmatpush1.msra.mxu0 0.0
    %95 = vmatprep.subr.mxu0 0.0
    %96 = vmatpush1.msra.mxu0 0.0
    %97 = vmatprep.subr.mxu0 0.0
    %98 = vmatpush1.msra.mxu0 0.0
    %99 = vmatprep.subr.mxu0 0.0
    %100 = vmatpush1.msra.mxu0 0.0
    %101 = vmatprep.subr.mxu0 0.0
    %v102 = vand.u32 %v69, 4294901760
    %103 = vmatpush1.msra.mxu0 %v102
    %104 = vmatprep.subr.mxu0 0.0
    %105 = vmatpush2.msra.mxu0 0.0
    %106 = vmatprep.subr.mxu0 0.0
    %107 = vmatpush2.msra.mxu0 0.0
    %108 = vmatprep.subr.mxu0 0.0
    %109 = vmatpush2.msra.mxu0 0.0
    %110 = vmatprep.subr.mxu0 0.0
    %111 = vmatpush2.msra.mxu0 0.0
    %112 = vmatprep.subr.mxu0 0.0
    %113 = vmatpush2.msra.mxu0 0.0
    %114 = vmatprep.subr.mxu0 0.0
    %115 = vmatpush2.msra.mxu0 0.0
    %116 = vmatprep.subr.mxu0 0.0
    %117 = vmatpush2.msra.mxu0 0.0
    %118 = vmatprep.subr.mxu0 0.0
    %119 = vmatpush2.msra.mxu0 0.0
    %120 = vmatprep.subr.mxu0 0.0
    %121 = vmatpush2.msra.mxu0 0.0
    %122 = vmatprep.subr.mxu0 0.0
    %123 = vmatpush2.msra.mxu0 0.0
    %124 = vmatprep.subr.mxu0 0.0
    %125 = vmatpush2.msra.mxu0 0.0
    %126 = vmatprep.subr.mxu0 0.0
    %127 = vmatpush2.msra.mxu0 0.0
    %128 = vmatprep.subr.mxu0 0.0
    %129 = vmatpush2.msra.mxu0 0.0
    %130 = vmatprep.subr.mxu0 0.0
    %131 = vmatpush2.msra.mxu0 0.0
    %132 = vmatprep.subr.mxu0 0.0
    %133 = vmatpush2.msra.mxu0 0.0
    %134 = vmatprep.subr.mxu0 0.0
    %135 = vmatpush2.msra.mxu0 0.0
    %136 = vmatprep.mubr.f32.mxu0 0.0
    %v137 = vand.u32 %v65, 4294901760
    %v138 = vsub.f32 %v65, %v137
    %v139 = vand.u32 %v138, 4294901760
    %v140 = vsub.f32 %v138, %v139
    %v141 = vand.u32 %v140, 4294901760
    %142 = vmatmul.mubr.f32.gmra.mxu0 %v141
    %v143 = vpop.f32.mrf.mxu0
    %v144 = vadd.f32 %v62, %v143
    %v145 = vpop.f32.mrf.mxu0
    %146 = vdwg.mxu0
    %147 = vmatprep.subr.mxu0 0.0
    %148 = vmatpush1.msra.mxu0 0.0
    %149 = vmatprep.subr.mxu0 0.0
    %150 = vmatpush1.msra.mxu0 0.0
    %151 = vmatprep.subr.mxu0 0.0
    %152 = vmatpush1.msra.mxu0 0.0
    %153 = vmatprep.subr.mxu0 0.0
    %154 = vmatpush1.msra.mxu0 0.0
    %155 = vmatprep.subr.mxu0 0.0
    %156 = vmatpush1.msra.mxu0 0.0
    %157 = vmatprep.subr.mxu0 0.0
    %158 = vmatpush1.msra.mxu0 0.0
    %159 = vmatprep.subr.mxu0 0.0
    %160 = vmatpush1.msra.mxu0 0.0
    %161 = vmatprep.subr.mxu0 0.0
    %162 = vmatpush1.msra.mxu0 0.0
    %163 = vmatprep.subr.mxu0 0.0
    %164 = vmatpush1.msra.mxu0 0.0
    %165 = vmatprep.subr.mxu0 0.0
    %166 = vmatpush1.msra.mxu0 0.0
    %167 = vmatprep.subr.mxu0 0.0
    %168 = vmatpush1.msra.mxu0 0.0
    %169 = vmatprep.subr.mxu0 0.0
    %170 = vmatpush1.msra.mxu0 0.0
    %171 = vmatprep.subr.mxu0 0.0
    %172 = vmatpush1.msra.mxu0 0.0
    %173 = vmatprep.subr.mxu0 0.0
    %174 = vmatpush1.msra.mxu0 0.0
    %175 = vmatprep.subr.mxu0 0.0
    %176 = vmatpush1.msra.mxu0 0.0
    %177 = vmatprep.subr.mxu0 0.0
    %v178 = vand.u32 %v69, 4294901760
    %v179 = vsub.f32 %v69, %v178
    %v180 = vand.u32 %v179, 4294901760
    %v181 = vsub.f32 %v179, %v180
    %v182 = vand.u32 %v181, 4294901760
    %183 = vmatpush1.msra.mxu0 %v182
    %184 = vmatprep.subr.mxu0 0.0
    %185 = vmatpush2.msra.mxu0 0.0
    %186 = vmatprep.subr.mxu0 0.0
    %187 = vmatpush2.msra.mxu0 0.0
    %188 = vmatprep.subr.mxu0 0.0
    %189 = vmatpush2.msra.mxu0 0.0
    %190 = vmatprep.subr.mxu0 0.0
    %191 = vmatpush2.msra.mxu0 0.0
    %192 = vmatprep.subr.mxu0 0.0
    %193 = vmatpush2.msra.mxu0 0.0
    %194 = vmatprep.subr.mxu0 0.0
    %195 = vmatpush2.msra.mxu0 0.0
    %196 = vmatprep.subr.mxu0 0.0
    %197 = vmatpush2.msra.mxu0 0.0
    %198 = vmatprep.subr.mxu0 0.0
    %199 = vmatpush2.msra.mxu0 0.0
    %200 = vmatprep.subr.mxu0 0.0
    %201 = vmatpush2.msra.mxu0 0.0
    %202 = vmatprep.subr.mxu0 0.0
    %203 = vmatpush2.msra.mxu0 0.0
    %204 = vmatprep.subr.mxu0 0.0
    %205 = vmatpush2.msra.mxu0 0.0
    %206 = vmatprep.subr.mxu0 0.0
    %207 = vmatpush2.msra.mxu0 0.0
    %208 = vmatprep.subr.mxu0 0.0
    %209 = vmatpush2.msra.mxu0 0.0
    %210 = vmatprep.subr.mxu0 0.0
    %211 = vmatpush2.msra.mxu0 0.0
    %212 = vmatprep.subr.mxu0 0.0
    %213 = vmatpush2.msra.mxu0 0.0
    %214 = vmatprep.subr.mxu0 0.0
    %215 = vmatpush2.msra.mxu0 0.0
    %216 = vmatprep.mubr.f32.mxu0 0.0
    %v217 = vand.u32 %v65, 4294901760
    %218 = vmatmul.mubr.f32.gmra.mxu0 %v217
    %v219 = vpop.f32.mrf.mxu0
    %v220 = vadd.f32 %v144, %v219
    %v221 = vpop.f32.mrf.mxu0
    %222 = vdwg.mxu0
    %223 = vmatprep.subr.mxu0 0.0
    %224 = vmatpush1.msra.mxu0 0.0
    %225 = vmatprep.subr.mxu0 0.0
    %226 = vmatpush1.msra.mxu0 0.0
    %227 = vmatprep.subr.mxu0 0.0
    %228 = vmatpush1.msra.mxu0 0.0
    %229 = vmatprep.subr.mxu0 0.0
    %230 = vmatpush1.msra.mxu0 0.0
    %231 = vmatprep.subr.mxu0 0.0
    %232 = vmatpush1.msra.mxu0 0.0
    %233 = vmatprep.subr.mxu0 0.0
    %234 = vmatpush1.msra.mxu0 0.0
    %235 = vmatprep.subr.mxu0 0.0
    %236 = vmatpush1.msra.mxu0 0.0
    %237 = vmatprep.subr.mxu0 0.0
    %238 = vmatpush1.msra.mxu0 0.0
    %239 = vmatprep.subr.mxu0 0.0
    %240 = vmatpush1.msra.mxu0 0.0
    %241 = vmatprep.subr.mxu0 0.0
    %242 = vmatpush1.msra.mxu0 0.0
    %243 = vmatprep.subr.mxu0 0.0
    %244 = vmatpush1.msra.mxu0 0.0
    %245 = vmatprep.subr.mxu0 0.0
    %246 = vmatpush1.msra.mxu0 0.0
    %247 = vmatprep.subr.mxu0 0.0
    %248 = vmatpush1.msra.mxu0 0.0
    %249 = vmatprep.subr.mxu0 0.0
    %250 = vmatpush1.msra.mxu0 0.0
    %251 = vmatprep.subr.mxu0 0.0
    %252 = vmatpush1.msra.mxu0 0.0
    %253 = vmatprep.subr.mxu0 0.0
    %v254 = vand.u32 %v69, 4294901760
    %v255 = vsub.f32 %v69, %v254
    %256 = vmatpush1.msra.mxu0 %v255
    %257 = vmatprep.subr.mxu0 0.0
    %258 = vmatpush2.msra.mxu0 0.0
    %259 = vmatprep.subr.mxu0 0.0
    %260 = vmatpush2.msra.mxu0 0.0
    %261 = vmatprep.subr.mxu0 0.0
    %262 = vmatpush2.msra.mxu0 0.0
    %263 = vmatprep.subr.mxu0 0.0
    %264 = vmatpush2.msra.mxu0 0.0
    %265 = vmatprep.subr.mxu0 0.0
    %266 = vmatpush2.msra.mxu0 0.0
    %267 = vmatprep.subr.mxu0 0.0
    %268 = vmatpush2.msra.mxu0 0.0
    %269 = vmatprep.subr.mxu0 0.0
    %270 = vmatpush2.msra.mxu0 0.0
    %271 = vmatprep.subr.mxu0 0.0
    %272 = vmatpush2.msra.mxu0 0.0
    %273 = vmatprep.subr.mxu0 0.0
    %274 = vmatpush2.msra.mxu0 0.0
    %275 = vmatprep.subr.mxu0 0.0
    %276 = vmatpush2.msra.mxu0 0.0
    %277 = vmatprep.subr.mxu0 0.0
    %278 = vmatpush2.msra.mxu0 0.0
    %279 = vmatprep.subr.mxu0 0.0
    %280 = vmatpush2.msra.mxu0 0.0
    %281 = vmatprep.subr.mxu0 0.0
    %282 = vmatpush2.msra.mxu0 0.0
    %283 = vmatprep.subr.mxu0 0.0
    %284 = vmatpush2.msra.mxu0 0.0
    %285 = vmatprep.subr.mxu0 0.0
    %286 = vmatpush2.msra.mxu0 0.0
    %287 = vmatprep.subr.mxu0 0.0
    %288 = vmatpush2.msra.mxu0 0.0
    %289 = vmatprep.mubr.f32.mxu0 0.0
    %v290 = vand.u32 %v65, 4294901760
    %v291 = vsub.f32 %v65, %v290
    %292 = vmatmul.mubr.f32.gmra.mxu0 %v291
    %v293 = vpop.f32.mrf.mxu0
    %v294 = vadd.f32 %v220, %v293
    %v295 = vpop.f32.mrf.mxu0
    %296 = vdwg.mxu0
    %297 = vmatprep.subr.mxu0 0.0
    %298 = vmatpush1.msra.mxu0 0.0
    %299 = vmatprep.subr.mxu0 0.0
    %300 = vmatpush1.msra.mxu0 0.0
    %301 = vmatprep.subr.mxu0 0.0
    %302 = vmatpush1.msra.mxu0 0.0
    %303 = vmatprep.subr.mxu0 0.0
    %304 = vmatpush1.msra.mxu0 0.0
    %305 = vmatprep.subr.mxu0 0.0
    %306 = vmatpush1.msra.mxu0 0.0
    %307 = vmatprep.subr.mxu0 0.0
    %308 = vmatpush1.msra.mxu0 0.0
    %309 = vmatprep.subr.mxu0 0.0
    %310 = vmatpush1.msra.mxu0 0.0
    %311 = vmatprep.subr.mxu0 0.0
    %312 = vmatpush1.msra.mxu0 0.0
    %313 = vmatprep.subr.mxu0 0.0
    %314 = vmatpush1.msra.mxu0 0.0
    %315 = vmatprep.subr.mxu0 0.0
    %316 = vmatpush1.msra.mxu0 0.0
    %317 = vmatprep.subr.mxu0 0.0
    %318 = vmatpush1.msra.mxu0 0.0
    %319 = vmatprep.subr.mxu0 0.0
    %320 = vmatpush1.msra.mxu0 0.0
    %321 = vmatprep.subr.mxu0 0.0
    %322 = vmatpush1.msra.mxu0 0.0
    %323 = vmatprep.subr.mxu0 0.0
    %324 = vmatpush1.msra.mxu0 0.0
    %325 = vmatprep.subr.mxu0 0.0
    %326 = vmatpush1.msra.mxu0 0.0
    %327 = vmatprep.subr.mxu0 0.0
    %v328 = vand.u32 %v69, 4294901760
    %329 = vmatpush1.msra.mxu0 %v328
    %330 = vmatprep.subr.mxu0 0.0
    %331 = vmatpush2.msra.mxu0 0.0
    %332 = vmatprep.subr.mxu0 0.0
    %333 = vmatpush2.msra.mxu0 0.0
    %334 = vmatprep.subr.mxu0 0.0
    %335 = vmatpush2.msra.mxu0 0.0
    %336 = vmatprep.subr.mxu0 0.0
    %337 = vmatpush2.msra.mxu0 0.0
    %338 = vmatprep.subr.mxu0 0.0
    %339 = vmatpush2.msra.mxu0 0.0
    %340 = vmatprep.subr.mxu0 0.0
    %341 = vmatpush2.msra.mxu0 0.0
    %342 = vmatprep.subr.mxu0 0.0
    %343 = vmatpush2.msra.mxu0 0.0
    %344 = vmatprep.subr.mxu0 0.0
    %345 = vmatpush2.msra.mxu0 0.0
    %346 = vmatprep.subr.mxu0 0.0
    %347 = vmatpush2.msra.mxu0 0.0
    %348 = vmatprep.subr.mxu0 0.0
    %349 = vmatpush2.msra.mxu0 0.0
    %350 = vmatprep.subr.mxu0 0.0
    %351 = vmatpush2.msra.mxu0 0.0
    %352 = vmatprep.subr.mxu0 0.0
    %353 = vmatpush2.msra.mxu0 0.0
    %354 = vmatprep.subr.mxu0 0.0
    %355 = vmatpush2.msra.mxu0 0.0
    %356 = vmatprep.subr.mxu0 0.0
    %357 = vmatpush2.msra.mxu0 0.0
    %358 = vmatprep.subr.mxu0 0.0
    %359 = vmatpush2.msra.mxu0 0.0
    %360 = vmatprep.subr.mxu0 0.0
    %361 = vmatpush2.msra.mxu0 0.0
    %362 = vmatprep.mubr.f32.mxu0 0.0
    %v363 = vand.u32 %v65, 4294901760
    %v364 = vsub.f32 %v65, %v363
    %v365 = vand.u32 %v364, 4294901760
    %366 = vmatmul.mubr.f32.gmra.mxu0 %v365
    %v367 = vpop.f32.mrf.mxu0
    %v368 = vadd.f32 %v294, %v367
    %v369 = vpop.f32.mrf.mxu0
    %370 = vdwg.mxu0
    %371 = vmatprep.subr.mxu0 0.0
    %372 = vmatpush1.msra.mxu0 0.0
    %373 = vmatprep.subr.mxu0 0.0
    %374 = vmatpush1.msra.mxu0 0.0
    %375 = vmatprep.subr.mxu0 0.0
    %376 = vmatpush1.msra.mxu0 0.0
    %377 = vmatprep.subr.mxu0 0.0
    %378 = vmatpush1.msra.mxu0 0.0
    %379 = vmatprep.subr.mxu0 0.0
    %380 = vmatpush1.msra.mxu0 0.0
    %381 = vmatprep.subr.mxu0 0.0
    %382 = vmatpush1.msra.mxu0 0.0
    %383 = vmatprep.subr.mxu0 0.0
    %384 = vmatpush1.msra.mxu0 0.0
    %385 = vmatprep.subr.mxu0 0.0
    %386 = vmatpush1.msra.mxu0 0.0
    %387 = vmatprep.subr.mxu0 0.0
    %388 = vmatpush1.msra.mxu0 0.0
    %389 = vmatprep.subr.mxu0 0.0
    %390 = vmatpush1.msra.mxu0 0.0
    %391 = vmatprep.subr.mxu0 0.0
    %392 = vmatpush1.msra.mxu0 0.0
    %393 = vmatprep.subr.mxu0 0.0
    %394 = vmatpush1.msra.mxu0 0.0
    %395 = vmatprep.subr.mxu0 0.0
    %396 = vmatpush1.msra.mxu0 0.0
    %397 = vmatprep.subr.mxu0 0.0
    %398 = vmatpush1.msra.mxu0 0.0
    %399 = vmatprep.subr.mxu0 0.0
    %400 = vmatpush1.msra.mxu0 0.0
    %401 = vmatprep.subr.mxu0 0.0
    %v402 = vand.u32 %v69, 4294901760
    %v403 = vsub.f32 %v69, %v402
    %v404 = vand.u32 %v403, 4294901760
    %405 = vmatpush1.msra.mxu0 %v404
    %406 = vmatprep.subr.mxu0 0.0
    %407 = vmatpush2.msra.mxu0 0.0
    %408 = vmatprep.subr.mxu0 0.0
    %409 = vmatpush2.msra.mxu0 0.0
    %410 = vmatprep.subr.mxu0 0.0
    %411 = vmatpush2.msra.mxu0 0.0
    %412 = vmatprep.subr.mxu0 0.0
    %413 = vmatpush2.msra.mxu0 0.0
    %414 = vmatprep.subr.mxu0 0.0
    %415 = vmatpush2.msra.mxu0 0.0
    %416 = vmatprep.subr.mxu0 0.0
    %417 = vmatpush2.msra.mxu0 0.0
    %418 = vmatprep.subr.mxu0 0.0
    %419 = vmatpush2.msra.mxu0 0.0
    %420 = vmatprep.subr.mxu0 0.0
    %421 = vmatpush2.msra.mxu0 0.0
    %422 = vmatprep.subr.mxu0 0.0
    %423 = vmatpush2.msra.mxu0 0.0
    %424 = vmatprep.subr.mxu0 0.0
    %425 = vmatpush2.msra.mxu0 0.0
    %426 = vmatprep.subr.mxu0 0.0
    %427 = vmatpush2.msra.mxu0 0.0
    %428 = vmatprep.subr.mxu0 0.0
    %429 = vmatpush2.msra.mxu0 0.0
    %430 = vmatprep.subr.mxu0 0.0
    %431 = vmatpush2.msra.mxu0 0.0
    %432 = vmatprep.subr.mxu0 0.0
    %433 = vmatpush2.msra.mxu0 0.0
    %434 = vmatprep.subr.mxu0 0.0
    %435 = vmatpush2.msra.mxu0 0.0
    %436 = vmatprep.subr.mxu0 0.0
    %437 = vmatpush2.msra.mxu0 0.0
    %438 = vmatprep.mubr.f32.mxu0 0.0
    %v439 = vand.u32 %v65, 4294901760
    %440 = vmatmul.mubr.f32.gmra.mxu0 %v439
    %v441 = vpop.f32.mrf.mxu0
    %v442 = vadd.f32 %v368, %v441
    %v443 = vpop.f32.mrf.mxu0
    %444 = vdwg.mxu0
    %445 = vmatprep.subr.mxu0 0.0
    %446 = vmatpush1.msra.mxu0 0.0
    %447 = vmatprep.subr.mxu0 0.0
    %448 = vmatpush1.msra.mxu0 0.0
    %449 = vmatprep.subr.mxu0 0.0
    %450 = vmatpush1.msra.mxu0 0.0
    %451 = vmatprep.subr.mxu0 0.0
    %452 = vmatpush1.msra.mxu0 0.0
    %453 = vmatprep.subr.mxu0 0.0
    %454 = vmatpush1.msra.mxu0 0.0
    %455 = vmatprep.subr.mxu0 0.0
    %456 = vmatpush1.msra.mxu0 0.0
    %457 = vmatprep.subr.mxu0 0.0
    %458 = vmatpush1.msra.mxu0 0.0
    %459 = vmatprep.subr.mxu0 0.0
    %460 = vmatpush1.msra.mxu0 0.0
    %461 = vmatprep.subr.mxu0 0.0
    %462 = vmatpush1.msra.mxu0 0.0
    %463 = vmatprep.subr.mxu0 0.0
    %464 = vmatpush1.msra.mxu0 0.0
    %465 = vmatprep.subr.mxu0 0.0
    %466 = vmatpush1.msra.mxu0 0.0
    %467 = vmatprep.subr.mxu0 0.0
    %468 = vmatpush1.msra.mxu0 0.0
    %469 = vmatprep.subr.mxu0 0.0
    %470 = vmatpush1.msra.mxu0 0.0
    %471 = vmatprep.subr.mxu0 0.0
    %472 = vmatpush1.msra.mxu0 0.0
    %473 = vmatprep.subr.mxu0 0.0
    %474 = vmatpush1.msra.mxu0 0.0
    %475 = vmatprep.subr.mxu0 0.0
    %v476 = vand.u32 %v69, 4294901760
    %477 = vmatpush1.msra.mxu0 %v476
    %478 = vmatprep.subr.mxu0 0.0
    %479 = vmatpush2.msra.mxu0 0.0
    %480 = vmatprep.subr.mxu0 0.0
    %481 = vmatpush2.msra.mxu0 0.0
    %482 = vmatprep.subr.mxu0 0.0
    %483 = vmatpush2.msra.mxu0 0.0
    %484 = vmatprep.subr.mxu0 0.0
    %485 = vmatpush2.msra.mxu0 0.0
    %486 = vmatprep.subr.mxu0 0.0
    %487 = vmatpush2.msra.mxu0 0.0
    %488 = vmatprep.subr.mxu0 0.0
    %489 = vmatpush2.msra.mxu0 0.0
    %490 = vmatprep.subr.mxu0 0.0
    %491 = vmatpush2.msra.mxu0 0.0
    %492 = vmatprep.subr.mxu0 0.0
    %493 = vmatpush2.msra.mxu0 0.0
    %494 = vmatprep.subr.mxu0 0.0
    %495 = vmatpush2.msra.mxu0 0.0
    %496 = vmatprep.subr.mxu0 0.0
    %497 = vmatpush2.msra.mxu0 0.0
    %498 = vmatprep.subr.mxu0 0.0
    %499 = vmatpush2.msra.mxu0 0.0
    %500 = vmatprep.subr.mxu0 0.0
    %501 = vmatpush2.msra.mxu0 0.0
    %502 = vmatprep.subr.mxu0 0.0
    %503 = vmatpush2.msra.mxu0 0.0
    %504 = vmatprep.subr.mxu0 0.0
    %505 = vmatpush2.msra.mxu0 0.0
    %506 = vmatprep.subr.mxu0 0.0
    %507 = vmatpush2.msra.mxu0 0.0
    %508 = vmatprep.subr.mxu0 0.0
    %509 = vmatpush2.msra.mxu0 0.0
    %510 = vmatprep.mubr.f32.mxu0 0.0
    %v511 = vand.u32 %v65, 4294901760
    %512 = vmatmul.mubr.f32.gmra.mxu0 %v511
    %v513 = vpop.f32.mrf.mxu0
    %v514 = vadd.f32 %v442, %v513
    %v515 = vpop.f32.mrf.mxu0
    %516 = vdwg.mxu0
    %v517 = vmax.f32 %v514, 0.0
    %v518 = vld [vmem:[#allocation4 + $0x8] sm:$0xff]
    %v519 = vld [vmem:[#allocation4 + $0x10] sm:$0xff]
    %v520 = vld [vmem:[#allocation4 + $0x18] sm:$0xff]
    %v521 = vld [vmem:[#allocation4 + $0x20] sm:$0xff]
    %v522 = vlaneseq
    %v523 = vshrl.u32 %v522, 7
    %v524 = vsub.s32 1, %v523
    %v525 = vrot.slane %v57, %v524
    %vm526 = vcmask 261120
    %v528 = vsel %vm526, %v517, 0
    %530 = vmatprep.subr.mxu0 0.0
    %531 = vmatpush1.msra.mxu0 0.0
    %532 = vmatprep.subr.mxu0 0.0
    %533 = vmatpush1.msra.mxu0 0.0
    %534 = vmatprep.subr.mxu0 0.0
    %535 = vmatpush1.msra.mxu0 0.0
    %536 = vmatprep.subr.mxu0 0.0
    %537 = vmatpush1.msra.mxu0 0.0
    %538 = vmatprep.subr.mxu0 0.0
    %539 = vmatpush1.msra.mxu0 0.0
    %540 = vmatprep.subr.mxu0 0.0
    %541 = vmatpush1.msra.mxu0 0.0
    %542 = vmatprep.subr.mxu0 0.0
    %543 = vmatpush1.msra.mxu0 0.0
    %544 = vmatprep.subr.mxu0 0.0
    %545 = vmatpush1.msra.mxu0 0.0
    %546 = vmatprep.subr.mxu0 0.0
    %547 = vmatpush1.msra.mxu0 0.0
    %548 = vmatprep.subr.mxu0 0.0
    %549 = vmatpush1.msra.mxu0 0.0
    %550 = vmatprep.subr.mxu0 0.0
    %551 = vmatpush1.msra.mxu0 0.0
    %552 = vmatprep.subr.mxu0 0.0
    %553 = vmatpush1.msra.mxu0 0.0
    %554 = vmatprep.subr.mxu0 0.0
    %v555 = vand.u32 %v521, 4294901760
    %556 = vmatpush1.msra.mxu0 %v555
    %557 = vmatprep.subr.mxu0 0.0
    %v558 = vand.u32 %v520, 4294901760
    %559 = vmatpush1.msra.mxu0 %v558
    %560 = vmatprep.subr.mxu0 0.0
    %v561 = vand.u32 %v519, 4294901760
    %562 = vmatpush1.msra.mxu0 %v561
    %563 = vmatprep.subr.mxu0 0.0
    %v564 = vand.u32 %v518, 4294901760
    %565 = vmatpush1.msra.mxu0 %v564
    %566 = vmatprep.subr.mxu0 0.0
    %567 = vmatpush2.msra.mxu0 0.0
    %568 = vmatprep.subr.mxu0 0.0
    %569 = vmatpush2.msra.mxu0 0.0
    %570 = vmatprep.subr.mxu0 0.0
    %571 = vmatpush2.msra.mxu0 0.0
    %572 = vmatprep.subr.mxu0 0.0
    %573 = vmatpush2.msra.mxu0 0.0
    %574 = vmatprep.subr.mxu0 0.0
    %575 = vmatpush2.msra.mxu0 0.0
    %576 = vmatprep.subr.mxu0 0.0
    %577 = vmatpush2.msra.mxu0 0.0
    %578 = vmatprep.subr.mxu0 0.0
    %579 = vmatpush2.msra.mxu0 0.0
    %580 = vmatprep.subr.mxu0 0.0
    %581 = vmatpush2.msra.mxu0 0.0
    %582 = vmatprep.subr.mxu0 0.0
    %583 = vmatpush2.msra.mxu0 0.0
    %584 = vmatprep.subr.mxu0 0.0
    %585 = vmatpush2.msra.mxu0 0.0
    %586 = vmatprep.subr.mxu0 0.0
    %587 = vmatpush2.msra.mxu0 0.0
    %588 = vmatprep.subr.mxu0 0.0
    %589 = vmatpush2.msra.mxu0 0.0
    %590 = vmatprep.subr.mxu0 0.0
    %591 = vmatpush2.msra.mxu0 0.0
    %592 = vmatprep.subr.mxu0 0.0
    %593 = vmatpush2.msra.mxu0 0.0
    %594 = vmatprep.subr.mxu0 0.0
    %595 = vmatpush2.msra.mxu0 0.0
    %596 = vmatprep.subr.mxu0 0.0
    %597 = vmatpush2.msra.mxu0 0.0
    %598 = vmatprep.mubr.f32.mxu0 0.0
    %v599 = vand.u32 %v528, 4294901760
    %v600 = vsub.f32 %v528, %v599
    %v601 = vand.u32 %v600, 4294901760
    %v602 = vsub.f32 %v600, %v601
    %v603 = vand.u32 %v602, 4294901760
    %604 = vmatmul.mubr.f32.gmra.mxu0 %v603
    %v605 = vpop.f32.mrf.mxu0
    %v606 = vadd.f32 %v525, %v605
    %v607 = vpop.f32.mrf.mxu0
    %608 = vdwg.mxu0
    %609 = vmatprep.subr.mxu0 0.0
    %610 = vmatpush1.msra.mxu0 0.0
    %611 = vmatprep.subr.mxu0 0.0
    %612 = vmatpush1.msra.mxu0 0.0
    %613 = vmatprep.subr.mxu0 0.0
    %614 = vmatpush1.msra.mxu0 0.0
    %615 = vmatprep.subr.mxu0 0.0
    %616 = vmatpush1.msra.mxu0 0.0
    %617 = vmatprep.subr.mxu0 0.0
    %618 = vmatpush1.msra.mxu0 0.0
    %619 = vmatprep.subr.mxu0 0.0
    %620 = vmatpush1.msra.mxu0 0.0
    %621 = vmatprep.subr.mxu0 0.0
    %622 = vmatpush1.msra.mxu0 0.0
    %623 = vmatprep.subr.mxu0 0.0
    %624 = vmatpush1.msra.mxu0 0.0
    %625 = vmatprep.subr.mxu0 0.0
    %626 = vmatpush1.msra.mxu0 0.0
    %627 = vmatprep.subr.mxu0 0.0
    %628 = vmatpush1.msra.mxu0 0.0
    %629 = vmatprep.subr.mxu0 0.0
    %630 = vmatpush1.msra.mxu0 0.0
    %631 = vmatprep.subr.mxu0 0.0
    %632 = vmatpush1.msra.mxu0 0.0
    %633 = vmatprep.subr.mxu0 0.0
    %v634 = vand.u32 %v521, 4294901760
    %v635 = vsub.f32 %v521, %v634
    %v636 = vand.u32 %v635, 4294901760
    %v637 = vsub.f32 %v635, %v636
    %v638 = vand.u32 %v637, 4294901760
    %639 = vmatpush1.msra.mxu0 %v638
    %640 = vmatprep.subr.mxu0 0.0
    %v641 = vand.u32 %v520, 4294901760
    %v642 = vsub.f32 %v520, %v641
    %v643 = vand.u32 %v642, 4294901760
    %v644 = vsub.f32 %v642, %v643
    %v645 = vand.u32 %v644, 4294901760
    %646 = vmatpush1.msra.mxu0 %v645
    %647 = vmatprep.subr.mxu0 0.0
    %v648 = vand.u32 %v519, 4294901760
    %v649 = vsub.f32 %v519, %v648
    %v650 = vand.u32 %v649, 4294901760
    %v651 = vsub.f32 %v649, %v650
    %v652 = vand.u32 %v651, 4294901760
    %653 = vmatpush1.msra.mxu0 %v652
    %654 = vmatprep.subr.mxu0 0.0
    %v655 = vand.u32 %v518, 4294901760
    %v656 = vsub.f32 %v518, %v655
    %v657 = vand.u32 %v656, 4294901760
    %v658 = vsub.f32 %v656, %v657
    %v659 = vand.u32 %v658, 4294901760
    %660 = vmatpush1.msra.mxu0 %v659
    %661 = vmatprep.subr.mxu0 0.0
    %662 = vmatpush2.msra.mxu0 0.0
    %663 = vmatprep.subr.mxu0 0.0
    %664 = vmatpush2.msra.mxu0 0.0
    %665 = vmatprep.subr.mxu0 0.0
    %666 = vmatpush2.msra.mxu0 0.0
    %667 = vmatprep.subr.mxu0 0.0
    %668 = vmatpush2.msra.mxu0 0.0
    %669 = vmatprep.subr.mxu0 0.0
    %670 = vmatpush2.msra.mxu0 0.0
    %671 = vmatprep.subr.mxu0 0.0
    %672 = vmatpush2.msra.mxu0 0.0
    %673 = vmatprep.subr.mxu0 0.0
    %674 = vmatpush2.msra.mxu0 0.0
    %675 = vmatprep.subr.mxu0 0.0
    %676 = vmatpush2.msra.mxu0 0.0
    %677 = vmatprep.subr.mxu0 0.0
    %678 = vmatpush2.msra.mxu0 0.0
    %679 = vmatprep.subr.mxu0 0.0
    %680 = vmatpush2.msra.mxu0 0.0
    %681 = vmatprep.subr.mxu0 0.0
    %682 = vmatpush2.msra.mxu0 0.0
    %683 = vmatprep.subr.mxu0 0.0
    %684 = vmatpush2.msra.mxu0 0.0
    %685 = vmatprep.subr.mxu0 0.0
    %686 = vmatpush2.msra.mxu0 0.0
    %687 = vmatprep.subr.mxu0 0.0
    %688 = vmatpush2.msra.mxu0 0.0
    %689 = vmatprep.subr.mxu0 0.0
    %690 = vmatpush2.msra.mxu0 0.0
    %691 = vmatprep.subr.mxu0 0.0
    %692 = vmatpush2.msra.mxu0 0.0
    %693 = vmatprep.mubr.f32.mxu0 0.0
    %v694 = vand.u32 %v528, 4294901760
    %695 = vmatmul.mubr.f32.gmra.mxu0 %v694
    %v696 = vpop.f32.mrf.mxu0
    %v697 = vadd.f32 %v606, %v696
    %v698 = vpop.f32.mrf.mxu0
    %699 = vdwg.mxu0
    %700 = vmatprep.subr.mxu0 0.0
    %701 = vmatpush1.msra.mxu0 0.0
    %702 = vmatprep.subr.mxu0 0.0
    %703 = vmatpush1.msra.mxu0 0.0
    %704 = vmatprep.subr.mxu0 0.0
    %705 = vmatpush1.msra.mxu0 0.0
    %706 = vmatprep.subr.mxu0 0.0
    %707 = vmatpush1.msra.mxu0 0.0
    %708 = vmatprep.subr.mxu0 0.0
    %709 = vmatpush1.msra.mxu0 0.0
    %710 = vmatprep.subr.mxu0 0.0
    %711 = vmatpush1.msra.mxu0 0.0
    %712 = vmatprep.subr.mxu0 0.0
    %713 = vmatpush1.msra.mxu0 0.0
    %714 = vmatprep.subr.mxu0 0.0
    %715 = vmatpush1.msra.mxu0 0.0
    %716 = vmatprep.subr.mxu0 0.0
    %717 = vmatpush1.msra.mxu0 0.0
    %718 = vmatprep.subr.mxu0 0.0
    %719 = vmatpush1.msra.mxu0 0.0
    %720 = vmatprep.subr.mxu0 0.0
    %721 = vmatpush1.msra.mxu0 0.0
    %722 = vmatprep.subr.mxu0 0.0
    %723 = vmatpush1.msra.mxu0 0.0
    %724 = vmatprep.subr.mxu0 0.0
    %v725 = vand.u32 %v521, 4294901760
    %v726 = vsub.f32 %v521, %v725
    %727 = vmatpush1.msra.mxu0 %v726
    %728 = vmatprep.subr.mxu0 0.0
    %v729 = vand.u32 %v520, 4294901760
    %v730 = vsub.f32 %v520, %v729
    %731 = vmatpush1.msra.mxu0 %v730
    %732 = vmatprep.subr.mxu0 0.0
    %v733 = vand.u32 %v519, 4294901760
    %v734 = vsub.f32 %v519, %v733
    %735 = vmatpush1.msra.mxu0 %v734
    %736 = vmatprep.subr.mxu0 0.0
    %v737 = vand.u32 %v518, 4294901760
    %v738 = vsub.f32 %v518, %v737
    %739 = vmatpush1.msra.mxu0 %v738
    %740 = vmatprep.subr.mxu0 0.0
    %741 = vmatpush2.msra.mxu0 0.0
    %742 = vmatprep.subr.mxu0 0.0
    %743 = vmatpush2.msra.mxu0 0.0
    %744 = vmatprep.subr.mxu0 0.0
    %745 = vmatpush2.msra.mxu0 0.0
    %746 = vmatprep.subr.mxu0 0.0
    %747 = vmatpush2.msra.mxu0 0.0
    %748 = vmatprep.subr.mxu0 0.0
    %749 = vmatpush2.msra.mxu0 0.0
    %750 = vmatprep.subr.mxu0 0.0
    %751 = vmatpush2.msra.mxu0 0.0
    %752 = vmatprep.subr.mxu0 0.0
    %753 = vmatpush2.msra.mxu0 0.0
    %754 = vmatprep.subr.mxu0 0.0
    %755 = vmatpush2.msra.mxu0 0.0
    %756 = vmatprep.subr.mxu0 0.0
    %757 = vmatpush2.msra.mxu0 0.0
    %758 = vmatprep.subr.mxu0 0.0
    %759 = vmatpush2.msra.mxu0 0.0
    %760 = vmatprep.subr.mxu0 0.0
    %761 = vmatpush2.msra.mxu0 0.0
    %762 = vmatprep.subr.mxu0 0.0
    %763 = vmatpush2.msra.mxu0 0.0
    %764 = vmatprep.subr.mxu0 0.0
    %765 = vmatpush2.msra.mxu0 0.0
    %766 = vmatprep.subr.mxu0 0.0
    %767 = vmatpush2.msra.mxu0 0.0
    %768 = vmatprep.subr.mxu0 0.0
    %769 = vmatpush2.msra.mxu0 0.0
    %770 = vmatprep.subr.mxu0 0.0
    %771 = vmatpush2.msra.mxu0 0.0
    %772 = vmatprep.mubr.f32.mxu0 0.0
    %v773 = vand.u32 %v528, 4294901760
    %v774 = vsub.f32 %v528, %v773
    %775 = vmatmul.mubr.f32.gmra.mxu0 %v774
    %v776 = vpop.f32.mrf.mxu0
    %v777 = vadd.f32 %v697, %v776
    %v778 = vpop.f32.mrf.mxu0
    %779 = vdwg.mxu0
    %780 = vmatprep.subr.mxu0 0.0
    %781 = vmatpush1.msra.mxu0 0.0
    %782 = vmatprep.subr.mxu0 0.0
    %783 = vmatpush1.msra.mxu0 0.0
    %784 = vmatprep.subr.mxu0 0.0
    %785 = vmatpush1.msra.mxu0 0.0
    %786 = vmatprep.subr.mxu0 0.0
    %787 = vmatpush1.msra.mxu0 0.0
    %788 = vmatprep.subr.mxu0 0.0
    %789 = vmatpush1.msra.mxu0 0.0
    %790 = vmatprep.subr.mxu0 0.0
    %791 = vmatpush1.msra.mxu0 0.0
    %792 = vmatprep.subr.mxu0 0.0
    %793 = vmatpush1.msra.mxu0 0.0
    %794 = vmatprep.subr.mxu0 0.0
    %795 = vmatpush1.msra.mxu0 0.0
    %796 = vmatprep.subr.mxu0 0.0
    %797 = vmatpush1.msra.mxu0 0.0
    %798 = vmatprep.subr.mxu0 0.0
    %799 = vmatpush1.msra.mxu0 0.0
    %800 = vmatprep.subr.mxu0 0.0
    %801 = vmatpush1.msra.mxu0 0.0
    %802 = vmatprep.subr.mxu0 0.0
    %803 = vmatpush1.msra.mxu0 0.0
    %804 = vmatprep.subr.mxu0 0.0
    %v805 = vand.u32 %v521, 4294901760
    %806 = vmatpush1.msra.mxu0 %v805
    %807 = vmatprep.subr.mxu0 0.0
    %v808 = vand.u32 %v520, 4294901760
    %809 = vmatpush1.msra.mxu0 %v808
    %810 = vmatprep.subr.mxu0 0.0
    %v811 = vand.u32 %v519, 4294901760
    %812 = vmatpush1.msra.mxu0 %v811
    %813 = vmatprep.subr.mxu0 0.0
    %v814 = vand.u32 %v518, 4294901760
    %815 = vmatpush1.msra.mxu0 %v814
    %816 = vmatprep.subr.mxu0 0.0
    %817 = vmatpush2.msra.mxu0 0.0
    %818 = vmatprep.subr.mxu0 0.0
    %819 = vmatpush2.msra.mxu0 0.0
    %820 = vmatprep.subr.mxu0 0.0
    %821 = vmatpush2.msra.mxu0 0.0
    %822 = vmatprep.subr.mxu0 0.0
    %823 = vmatpush2.msra.mxu0 0.0
    %824 = vmatprep.subr.mxu0 0.0
    %825 = vmatpush2.msra.mxu0 0.0
    %826 = vmatprep.subr.mxu0 0.0
    %827 = vmatpush2.msra.mxu0 0.0
    %828 = vmatprep.subr.mxu0 0.0
    %829 = vmatpush2.msra.mxu0 0.0
    %830 = vmatprep.subr.mxu0 0.0
    %831 = vmatpush2.msra.mxu0 0.0
    %832 = vmatprep.subr.mxu0 0.0
    %833 = vmatpush2.msra.mxu0 0.0
    %834 = vmatprep.subr.mxu0 0.0
    %835 = vmatpush2.msra.mxu0 0.0
    %836 = vmatprep.subr.mxu0 0.0
    %837 = vmatpush2.msra.mxu0 0.0
    %838 = vmatprep.subr.mxu0 0.0
    %839 = vmatpush2.msra.mxu0 0.0
    %840 = vmatprep.subr.mxu0 0.0
    %841 = vmatpush2.msra.mxu0 0.0
    %842 = vmatprep.subr.mxu0 0.0
    %843 = vmatpush2.msra.mxu0 0.0
    %844 = vmatprep.subr.mxu0 0.0
    %845 = vmatpush2.msra.mxu0 0.0
    %846 = vmatprep.subr.mxu0 0.0
    %847 = vmatpush2.msra.mxu0 0.0
    %848 = vmatprep.mubr.f32.mxu0 0.0
    %v849 = vand.u32 %v528, 4294901760
    %v850 = vsub.f32 %v528, %v849
    %v851 = vand.u32 %v850, 4294901760
    %852 = vmatmul.mubr.f32.gmra.mxu0 %v851
    %v853 = vpop.f32.mrf.mxu0
    %v854 = vadd.f32 %v777, %v853
    %v855 = vpop.f32.mrf.mxu0
    %856 = vdwg.mxu0
    %857 = vmatprep.subr.mxu0 0.0
    %858 = vmatpush1.msra.mxu0 0.0
    %859 = vmatprep.subr.mxu0 0.0
    %860 = vmatpush1.msra.mxu0 0.0
    %861 = vmatprep.subr.mxu0 0.0
    %862 = vmatpush1.msra.mxu0 0.0
    %863 = vmatprep.subr.mxu0 0.0
    %864 = vmatpush1.msra.mxu0 0.0
    %865 = vmatprep.subr.mxu0 0.0
    %866 = vmatpush1.msra.mxu0 0.0
    %867 = vmatprep.subr.mxu0 0.0
    %868 = vmatpush1.msra.mxu0 0.0
    %869 = vmatprep.subr.mxu0 0.0
    %870 = vmatpush1.msra.mxu0 0.0
    %871 = vmatprep.subr.mxu0 0.0
    %872 = vmatpush1.msra.mxu0 0.0
    %873 = vmatprep.subr.mxu0 0.0
    %874 = vmatpush1.msra.mxu0 0.0
    %875 = vmatprep.subr.mxu0 0.0
    %876 = vmatpush1.msra.mxu0 0.0
    %877 = vmatprep.subr.mxu0 0.0
    %878 = vmatpush1.msra.mxu0 0.0
    %879 = vmatprep.subr.mxu0 0.0
    %880 = vmatpush1.msra.mxu0 0.0
    %881 = vmatprep.subr.mxu0 0.0
    %v882 = vand.u32 %v521, 4294901760
    %v883 = vsub.f32 %v521, %v882
    %v884 = vand.u32 %v883, 4294901760
    %885 = vmatpush1.msra.mxu0 %v884
    %886 = vmatprep.subr.mxu0 0.0
    %v887 = vand.u32 %v520, 4294901760
    %v888 = vsub.f32 %v520, %v887
    %v889 = vand.u32 %v888, 4294901760
    %890 = vmatpush1.msra.mxu0 %v889
    %891 = vmatprep.subr.mxu0 0.0
    %v892 = vand.u32 %v519, 4294901760
    %v893 = vsub.f32 %v519, %v892
    %v894 = vand.u32 %v893, 4294901760
    %895 = vmatpush1.msra.mxu0 %v894
    %896 = vmatprep.subr.mxu0 0.0
    %v897 = vand.u32 %v518, 4294901760
    %v898 = vsub.f32 %v518, %v897
    %v899 = vand.u32 %v898, 4294901760
    %900 = vmatpush1.msra.mxu0 %v899
    %901 = vmatprep.subr.mxu0 0.0
    %902 = vmatpush2.msra.mxu0 0.0
    %903 = vmatprep.subr.mxu0 0.0
    %904 = vmatpush2.msra.mxu0 0.0
    %905 = vmatprep.subr.mxu0 0.0
    %906 = vmatpush2.msra.mxu0 0.0
    %907 = vmatprep.subr.mxu0 0.0
    %908 = vmatpush2.msra.mxu0 0.0
    %909 = vmatprep.subr.mxu0 0.0
    %910 = vmatpush2.msra.mxu0 0.0
    %911 = vmatprep.subr.mxu0 0.0
    %912 = vmatpush2.msra.mxu0 0.0
    %913 = vmatprep.subr.mxu0 0.0
    %914 = vmatpush2.msra.mxu0 0.0
    %915 = vmatprep.subr.mxu0 0.0
    %916 = vmatpush2.msra.mxu0 0.0
    %917 = vmatprep.subr.mxu0 0.0
    %918 = vmatpush2.msra.mxu0 0.0
    %919 = vmatprep.subr.mxu0 0.0
    %920 = vmatpush2.msra.mxu0 0.0
    %921 = vmatprep.subr.mxu0 0.0
    %922 = vmatpush2.msra.mxu0 0.0
    %923 = vmatprep.subr.mxu0 0.0
    %924 = vmatpush2.msra.mxu0 0.0
    %925 = vmatprep.subr.mxu0 0.0
    %926 = vmatpush2.msra.mxu0 0.0
    %927 = vmatprep.subr.mxu0 0.0
    %928 = vmatpush2.msra.mxu0 0.0
    %929 = vmatprep.subr.mxu0 0.0
    %930 = vmatpush2.msra.mxu0 0.0
    %931 = vmatprep.subr.mxu0 0.0
    %932 = vmatpush2.msra.mxu0 0.0
    %933 = vmatprep.mubr.f32.mxu0 0.0
    %v934 = vand.u32 %v528, 4294901760
    %935 = vmatmul.mubr.f32.gmra.mxu0 %v934
    %v936 = vpop.f32.mrf.mxu0
    %v937 = vadd.f32 %v854, %v936
    %v938 = vpop.f32.mrf.mxu0
    %939 = vdwg.mxu0
    %940 = vmatprep.subr.mxu0 0.0
    %941 = vmatpush1.msra.mxu0 0.0
    %942 = vmatprep.subr.mxu0 0.0
    %943 = vmatpush1.msra.mxu0 0.0
    %944 = vmatprep.subr.mxu0 0.0
    %945 = vmatpush1.msra.mxu0 0.0
    %946 = vmatprep.subr.mxu0 0.0
    %947 = vmatpush1.msra.mxu0 0.0
    %948 = vmatprep.subr.mxu0 0.0
    %949 = vmatpush1.msra.mxu0 0.0
    %950 = vmatprep.subr.mxu0 0.0
    %951 = vmatpush1.msra.mxu0 0.0
    %952 = vmatprep.subr.mxu0 0.0
    %953 = vmatpush1.msra.mxu0 0.0
    %954 = vmatprep.subr.mxu0 0.0
    %955 = vmatpush1.msra.mxu0 0.0
    %956 = vmatprep.subr.mxu0 0.0
    %957 = vmatpush1.msra.mxu0 0.0
    %958 = vmatprep.subr.mxu0 0.0
    %959 = vmatpush1.msra.mxu0 0.0
    %960 = vmatprep.subr.mxu0 0.0
    %961 = vmatpush1.msra.mxu0 0.0
    %962 = vmatprep.subr.mxu0 0.0
    %963 = vmatpush1.msra.mxu0 0.0
    %964 = vmatprep.subr.mxu0 0.0
    %v965 = vand.u32 %v521, 4294901760
    %966 = vmatpush1.msra.mxu0 %v965
    %967 = vmatprep.subr.mxu0 0.0
    %v968 = vand.u32 %v520, 4294901760
    %969 = vmatpush1.msra.mxu0 %v968
    %970 = vmatprep.subr.mxu0 0.0
    %v971 = vand.u32 %v519, 4294901760
    %972 = vmatpush1.msra.mxu0 %v971
    %973 = vmatprep.subr.mxu0 0.0
    %v974 = vand.u32 %v518, 4294901760
    %975 = vmatpush1.msra.mxu0 %v974
    %976 = vmatprep.subr.mxu0 0.0
    %977 = vmatpush2.msra.mxu0 0.0
    %978 = vmatprep.subr.mxu0 0.0
    %979 = vmatpush2.msra.mxu0 0.0
    %980 = vmatprep.subr.mxu0 0.0
    %981 = vmatpush2.msra.mxu0 0.0
    %982 = vmatprep.subr.mxu0 0.0
    %983 = vmatpush2.msra.mxu0 0.0
    %984 = vmatprep.subr.mxu0 0.0
    %985 = vmatpush2.msra.mxu0 0.0
    %986 = vmatprep.subr.mxu0 0.0
    %987 = vmatpush2.msra.mxu0 0.0
    %988 = vmatprep.subr.mxu0 0.0
    %989 = vmatpush2.msra.mxu0 0.0
    %990 = vmatprep.subr.mxu0 0.0
    %991 = vmatpush2.msra.mxu0 0.0
    %992 = vmatprep.subr.mxu0 0.0
    %993 = vmatpush2.msra.mxu0 0.0
    %994 = vmatprep.subr.mxu0 0.0
    %995 = vmatpush2.msra.mxu0 0.0
    %996 = vmatprep.subr.mxu0 0.0
    %997 = vmatpush2.msra.mxu0 0.0
    %998 = vmatprep.subr.mxu0 0.0
    %999 = vmatpush2.msra.mxu0 0.0
    %1000 = vmatprep.subr.mxu0 0.0
    %1001 = vmatpush2.msra.mxu0 0.0
    %1002 = vmatprep.subr.mxu0 0.0
    %1003 = vmatpush2.msra.mxu0 0.0
    %1004 = vmatprep.subr.mxu0 0.0
    %1005 = vmatpush2.msra.mxu0 0.0
    %1006 = vmatprep.subr.mxu0 0.0
    %1007 = vmatpush2.msra.mxu0 0.0
    %1008 = vmatprep.mubr.f32.mxu0 0.0
    %v1009 = vand.u32 %v528, 4294901760
    %1010 = vmatmul.mubr.f32.gmra.mxu0 %v1009
    %v1011 = vpop.f32.mrf.mxu0
    %v1012 = vadd.f32 %v937, %v1011
    %v1013 = vpop.f32.mrf.mxu0
    %1014 = vdwg.mxu0
    %v1015 = vmax.f32 %v1012, 0.0
    %v1016 = vld [vmem:[#allocation4 + $0x28] sm:$0xff]
    %v1017 = vld [vmem:[#allocation4 + $0x30] sm:$0xff]
    %v1018 = vld [vmem:[#allocation4 + $0x38] sm:$0xff]
    %v1019 = vld [vmem:[#allocation4 + $0x40] sm:$0xff]
    %v1020 = vld [vmem:[#allocation4 + $0x48] sm:$0xff]
    %v1021 = vld [vmem:[#allocation4 + $0x50] sm:$0xff]
    %v1022 = vld [vmem:[#allocation4 + $0x58] sm:$0xff]
    %v1023 = vld [vmem:[#allocation4 + $0x60] sm:$0xff]
    %v1024 = vlaneseq
    %v1025 = vshrl.u32 %v1024, 7
    %v1026 = vsub.s32 2, %v1025
    %v1027 = vrot.slane %v57, %v1026
    %vm1028 = vcmask 523264
    %v1030 = vsel %vm1028, %v1015, 0
    %1032 = vmatprep.subr.mxu0 0.0
    %1033 = vmatpush1.msra.mxu0 0.0
    %1034 = vmatprep.subr.mxu0 0.0
    %1035 = vmatpush1.msra.mxu0 0.0
    %1036 = vmatprep.subr.mxu0 0.0
    %1037 = vmatpush1.msra.mxu0 0.0
    %1038 = vmatprep.subr.mxu0 0.0
    %1039 = vmatpush1.msra.mxu0 0.0
    %1040 = vmatprep.subr.mxu0 0.0
    %1041 = vmatpush1.msra.mxu0 0.0
    %1042 = vmatprep.subr.mxu0 0.0
    %1043 = vmatpush1.msra.mxu0 0.0
    %1044 = vmatprep.subr.mxu0 0.0
    %1045 = vmatpush1.msra.mxu0 0.0
    %1046 = vmatprep.subr.mxu0 0.0
    %1047 = vmatpush1.msra.mxu0 0.0
    %1048 = vmatprep.subr.mxu0 0.0
    %v1049 = vand.u32 %v1023, 4294901760
    %1050 = vmatpush1.msra.mxu0 %v1049
    %1051 = vmatprep.subr.mxu0 0.0
    %v1052 = vand.u32 %v1022, 4294901760
    %1053 = vmatpush1.msra.mxu0 %v1052
    %1054 = vmatprep.subr.mxu0 0.0
    %v1055 = vand.u32 %v1021, 4294901760
    %1056 = vmatpush1.msra.mxu0 %v1055
    %1057 = vmatprep.subr.mxu0 0.0
    %v1058 = vand.u32 %v1020, 4294901760
    %1059 = vmatpush1.msra.mxu0 %v1058
    %1060 = vmatprep.subr.mxu0 0.0
    %v1061 = vand.u32 %v1019, 4294901760
    %1062 = vmatpush1.msra.mxu0 %v1061
    %1063 = vmatprep.subr.mxu0 0.0
    %v1064 = vand.u32 %v1018, 4294901760
    %1065 = vmatpush1.msra.mxu0 %v1064
    %1066 = vmatprep.subr.mxu0 0.0
    %v1067 = vand.u32 %v1017, 4294901760
    %1068 = vmatpush1.msra.mxu0 %v1067
    %1069 = vmatprep.subr.mxu0 0.0
    %v1070 = vand.u32 %v1016, 4294901760
    %1071 = vmatpush1.msra.mxu0 %v1070
    %1072 = vmatprep.subr.mxu0 0.0
    %1073 = vmatpush2.msra.mxu0 0.0
    %1074 = vmatprep.subr.mxu0 0.0
    %1075 = vmatpush2.msra.mxu0 0.0
    %1076 = vmatprep.subr.mxu0 0.0
    %1077 = vmatpush2.msra.mxu0 0.0
    %1078 = vmatprep.subr.mxu0 0.0
    %1079 = vmatpush2.msra.mxu0 0.0
    %1080 = vmatprep.subr.mxu0 0.0
    %1081 = vmatpush2.msra.mxu0 0.0
    %1082 = vmatprep.subr.mxu0 0.0
    %1083 = vmatpush2.msra.mxu0 0.0
    %1084 = vmatprep.subr.mxu0 0.0
    %1085 = vmatpush2.msra.mxu0 0.0
    %1086 = vmatprep.subr.mxu0 0.0
    %1087 = vmatpush2.msra.mxu0 0.0
    %1088 = vmatprep.subr.mxu0 0.0
    %1089 = vmatpush2.msra.mxu0 0.0
    %1090 = vmatprep.subr.mxu0 0.0
    %1091 = vmatpush2.msra.mxu0 0.0
    %1092 = vmatprep.subr.mxu0 0.0
    %1093 = vmatpush2.msra.mxu0 0.0
    %1094 = vmatprep.subr.mxu0 0.0
    %1095 = vmatpush2.msra.mxu0 0.0
    %1096 = vmatprep.subr.mxu0 0.0
    %1097 = vmatpush2.msra.mxu0 0.0
    %1098 = vmatprep.subr.mxu0 0.0
    %1099 = vmatpush2.msra.mxu0 0.0
    %1100 = vmatprep.subr.mxu0 0.0
    %1101 = vmatpush2.msra.mxu0 0.0
    %1102 = vmatprep.subr.mxu0 0.0
    %1103 = vmatpush2.msra.mxu0 0.0
    %1104 = vmatprep.mubr.f32.mxu0 0.0
    %v1105 = vand.u32 %v1030, 4294901760
    %v1106 = vsub.f32 %v1030, %v1105
    %v1107 = vand.u32 %v1106, 4294901760
    %v1108 = vsub.f32 %v1106, %v1107
    %v1109 = vand.u32 %v1108, 4294901760
    %1110 = vmatmul.mubr.f32.gmra.mxu0 %v1109
    %v1111 = vpop.f32.mrf.mxu0
    %v1112 = vadd.f32 %v1027, %v1111
    %v1113 = vpop.f32.mrf.mxu0
    %1114 = vdwg.mxu0
    %1115 = vmatprep.subr.mxu0 0.0
    %1116 = vmatpush1.msra.mxu0 0.0
    %1117 = vmatprep.subr.mxu0 0.0
    %1118 = vmatpush1.msra.mxu0 0.0
    %1119 = vmatprep.subr.mxu0 0.0
    %1120 = vmatpush1.msra.mxu0 0.0
    %1121 = vmatprep.subr.mxu0 0.0
    %1122 = vmatpush1.msra.mxu0 0.0
    %1123 = vmatprep.subr.mxu0 0.0
    %1124 = vmatpush1.msra.mxu0 0.0
    %1125 = vmatprep.subr.mxu0 0.0
    %1126 = vmatpush1.msra.mxu0 0.0
    %1127 = vmatprep.subr.mxu0 0.0
    %1128 = vmatpush1.msra.mxu0 0.0
    %1129 = vmatprep.subr.mxu0 0.0
    %1130 = vmatpush1.msra.mxu0 0.0
    %1131 = vmatprep.subr.mxu0 0.0
    %v1132 = vand.u32 %v1023, 4294901760
    %v1133 = vsub.f32 %v1023, %v1132
    %v1134 = vand.u32 %v1133, 4294901760
    %v1135 = vsub.f32 %v1133, %v1134
    %v1136 = vand.u32 %v1135, 4294901760
    %1137 = vmatpush1.msra.mxu0 %v1136
    %1138 = vmatprep.subr.mxu0 0.0
    %v1139 = vand.u32 %v1022, 4294901760
    %v1140 = vsub.f32 %v1022, %v1139
    %v1141 = vand.u32 %v1140, 4294901760
    %v1142 = vsub.f32 %v1140, %v1141
    %v1143 = vand.u32 %v1142, 4294901760
    %1144 = vmatpush1.msra.mxu0 %v1143
    %1145 = vmatprep.subr.mxu0 0.0
    %v1146 = vand.u32 %v1021, 4294901760
    %v1147 = vsub.f32 %v1021, %v1146
    %v1148 = vand.u32 %v1147, 4294901760
    %v1149 = vsub.f32 %v1147, %v1148
    %v1150 = vand.u32 %v1149, 4294901760
    %1151 = vmatpush1.msra.mxu0 %v1150
    %1152 = vmatprep.subr.mxu0 0.0
    %v1153 = vand.u32 %v1020, 4294901760
    %v1154 = vsub.f32 %v1020, %v1153
    %v1155 = vand.u32 %v1154, 4294901760
    %v1156 = vsub.f32 %v1154, %v1155
    %v1157 = vand.u32 %v1156, 4294901760
    %1158 = vmatpush1.msra.mxu0 %v1157
    %1159 = vmatprep.subr.mxu0 0.0
    %v1160 = vand.u32 %v1019, 4294901760
    %v1161 = vsub.f32 %v1019, %v1160
    %v1162 = vand.u32 %v1161, 4294901760
    %v1163 = vsub.f32 %v1161, %v1162
    %v1164 = vand.u32 %v1163, 4294901760
    %1165 = vmatpush1.msra.mxu0 %v1164
    %1166 = vmatprep.subr.mxu0 0.0
    %v1167 = vand.u32 %v1018, 4294901760
    %v1168 = vsub.f32 %v1018, %v1167
    %v1169 = vand.u32 %v1168, 4294901760
    %v1170 = vsub.f32 %v1168, %v1169
    %v1171 = vand.u32 %v1170, 4294901760
    %1172 = vmatpush1.msra.mxu0 %v1171
    %1173 = vmatprep.subr.mxu0 0.0
    %v1174 = vand.u32 %v1017, 4294901760
    %v1175 = vsub.f32 %v1017, %v1174
    %v1176 = vand.u32 %v1175, 4294901760
    %v1177 = vsub.f32 %v1175, %v1176
    %v1178 = vand.u32 %v1177, 4294901760
    %1179 = vmatpush1.msra.mxu0 %v1178
    %1180 = vmatprep.subr.mxu0 0.0
    %v1181 = vand.u32 %v1016, 4294901760
    %v1182 = vsub.f32 %v1016, %v1181
    %v1183 = vand.u32 %v1182, 4294901760
    %v1184 = vsub.f32 %v1182, %v1183
    %v1185 = vand.u32 %v1184, 4294901760
    %1186 = vmatpush1.msra.mxu0 %v1185
    %1187 = vmatprep.subr.mxu0 0.0
    %1188 = vmatpush2.msra.mxu0 0.0
    %1189 = vmatprep.subr.mxu0 0.0
    %1190 = vmatpush2.msra.mxu0 0.0
    %1191 = vmatprep.subr.mxu0 0.0
    %1192 = vmatpush2.msra.mxu0 0.0
    %1193 = vmatprep.subr.mxu0 0.0
    %1194 = vmatpush2.msra.mxu0 0.0
    %1195 = vmatprep.subr.mxu0 0.0
    %1196 = vmatpush2.msra.mxu0 0.0
    %1197 = vmatprep.subr.mxu0 0.0
    %1198 = vmatpush2.msra.mxu0 0.0
    %1199 = vmatprep.subr.mxu0 0.0
    %1200 = vmatpush2.msra.mxu0 0.0
    %1201 = vmatprep.subr.mxu0 0.0
    %1202 = vmatpush2.msra.mxu0 0.0
    %1203 = vmatprep.subr.mxu0 0.0
    %1204 = vmatpush2.msra.mxu0 0.0
    %1205 = vmatprep.subr.mxu0 0.0
    %1206 = vmatpush2.msra.mxu0 0.0
    %1207 = vmatprep.subr.mxu0 0.0
    %1208 = vmatpush2.msra.mxu0 0.0
    %1209 = vmatprep.subr.mxu0 0.0
    %1210 = vmatpush2.msra.mxu0 0.0
    %1211 = vmatprep.subr.mxu0 0.0
    %1212 = vmatpush2.msra.mxu0 0.0
    %1213 = vmatprep.subr.mxu0 0.0
    %1214 = vmatpush2.msra.mxu0 0.0
    %1215 = vmatprep.subr.mxu0 0.0
    %1216 = vmatpush2.msra.mxu0 0.0
    %1217 = vmatprep.subr.mxu0 0.0
    %1218 = vmatpush2.msra.mxu0 0.0
    %1219 = vmatprep.mubr.f32.mxu0 0.0
    %v1220 = vand.u32 %v1030, 4294901760
    %1221 = vmatmul.mubr.f32.gmra.mxu0 %v1220
    %v1222 = vpop.f32.mrf.mxu0
    %v1223 = vadd.f32 %v1112, %v1222
    %v1224 = vpop.f32.mrf.mxu0
    %1225 = vdwg.mxu0
    %1226 = vmatprep.subr.mxu0 0.0
    %1227 = vmatpush1.msra.mxu0 0.0
    %1228 = vmatprep.subr.mxu0 0.0
    %1229 = vmatpush1.msra.mxu0 0.0
    %1230 = vmatprep.subr.mxu0 0.0
    %1231 = vmatpush1.msra.mxu0 0.0
    %1232 = vmatprep.subr.mxu0 0.0
    %1233 = vmatpush1.msra.mxu0 0.0
    %1234 = vmatprep.subr.mxu0 0.0
    %1235 = vmatpush1.msra.mxu0 0.0
    %1236 = vmatprep.subr.mxu0 0.0
    %1237 = vmatpush1.msra.mxu0 0.0
    %1238 = vmatprep.subr.mxu0 0.0
    %1239 = vmatpush1.msra.mxu0 0.0
    %1240 = vmatprep.subr.mxu0 0.0
    %1241 = vmatpush1.msra.mxu0 0.0
    %1242 = vmatprep.subr.mxu0 0.0
    %v1243 = vand.u32 %v1023, 4294901760
    %v1244 = vsub.f32 %v1023, %v1243
    %1245 = vmatpush1.msra.mxu0 %v1244
    %1246 = vmatprep.subr.mxu0 0.0
    %v1247 = vand.u32 %v1022, 4294901760
    %v1248 = vsub.f32 %v1022, %v1247
    %1249 = vmatpush1.msra.mxu0 %v1248
    %1250 = vmatprep.subr.mxu0 0.0
    %v1251 = vand.u32 %v1021, 4294901760
    %v1252 = vsub.f32 %v1021, %v1251
    %1253 = vmatpush1.msra.mxu0 %v1252
    %1254 = vmatprep.subr.mxu0 0.0
    %v1255 = vand.u32 %v1020, 4294901760
    %v1256 = vsub.f32 %v1020, %v1255
    %1257 = vmatpush1.msra.mxu0 %v1256
    %1258 = vmatprep.subr.mxu0 0.0
    %v1259 = vand.u32 %v1019, 4294901760
    %v1260 = vsub.f32 %v1019, %v1259
    %1261 = vmatpush1.msra.mxu0 %v1260
    %1262 = vmatprep.subr.mxu0 0.0
    %v1263 = vand.u32 %v1018, 4294901760
    %v1264 = vsub.f32 %v1018, %v1263
    %1265 = vmatpush1.msra.mxu0 %v1264
    %1266 = vmatprep.subr.mxu0 0.0
    %v1267 = vand.u32 %v1017, 4294901760
    %v1268 = vsub.f32 %v1017, %v1267
    %1269 = vmatpush1.msra.mxu0 %v1268
    %1270 = vmatprep.subr.mxu0 0.0
    %v1271 = vand.u32 %v1016, 4294901760
    %v1272 = vsub.f32 %v1016, %v1271
    %1273 = vmatpush1.msra.mxu0 %v1272
    %1274 = vmatprep.subr.mxu0 0.0
    %1275 = vmatpush2.msra.mxu0 0.0
    %1276 = vmatprep.subr.mxu0 0.0
    %1277 = vmatpush2.msra.mxu0 0.0
    %1278 = vmatprep.subr.mxu0 0.0
    %1279 = vmatpush2.msra.mxu0 0.0
    %1280 = vmatprep.subr.mxu0 0.0
    %1281 = vmatpush2.msra.mxu0 0.0
    %1282 = vmatprep.subr.mxu0 0.0
    %1283 = vmatpush2.msra.mxu0 0.0
    %1284 = vmatprep.subr.mxu0 0.0
    %1285 = vmatpush2.msra.mxu0 0.0
    %1286 = vmatprep.subr.mxu0 0.0
    %1287 = vmatpush2.msra.mxu0 0.0
    %1288 = vmatprep.subr.mxu0 0.0
    %1289 = vmatpush2.msra.mxu0 0.0
    %1290 = vmatprep.subr.mxu0 0.0
    %1291 = vmatpush2.msra.mxu0 0.0
    %1292 = vmatprep.subr.mxu0 0.0
    %1293 = vmatpush2.msra.mxu0 0.0
    %1294 = vmatprep.subr.mxu0 0.0
    %1295 = vmatpush2.msra.mxu0 0.0
    %1296 = vmatprep.subr.mxu0 0.0
    %1297 = vmatpush2.msra.mxu0 0.0
    %1298 = vmatprep.subr.mxu0 0.0
    %1299 = vmatpush2.msra.mxu0 0.0
    %1300 = vmatprep.subr.mxu0 0.0
    %1301 = vmatpush2.msra.mxu0 0.0
    %1302 = vmatprep.subr.mxu0 0.0
    %1303 = vmatpush2.msra.mxu0 0.0
    %1304 = vmatprep.subr.mxu0 0.0
    %1305 = vmatpush2.msra.mxu0 0.0
    %1306 = vmatprep.mubr.f32.mxu0 0.0
    %v1307 = vand.u32 %v1030, 4294901760
    %v1308 = vsub.f32 %v1030, %v1307
    %1309 = vmatmul.mubr.f32.gmra.mxu0 %v1308
    %v1310 = vpop.f32.mrf.mxu0
    %v1311 = vadd.f32 %v1223, %v1310
    %v1312 = vpop.f32.mrf.mxu0
    %1313 = vdwg.mxu0
    %1314 = vmatprep.subr.mxu0 0.0
    %1315 = vmatpush1.msra.mxu0 0.0
    %1316 = vmatprep.subr.mxu0 0.0
    %1317 = vmatpush1.msra.mxu0 0.0
    %1318 = vmatprep.subr.mxu0 0.0
    %1319 = vmatpush1.msra.mxu0 0.0
    %1320 = vmatprep.subr.mxu0 0.0
    %1321 = vmatpush1.msra.mxu0 0.0
    %1322 = vmatprep.subr.mxu0 0.0
    %1323 = vmatpush1.msra.mxu0 0.0
    %1324 = vmatprep.subr.mxu0 0.0
    %1325 = vmatpush1.msra.mxu0 0.0
    %1326 = vmatprep.subr.mxu0 0.0
    %1327 = vmatpush1.msra.mxu0 0.0
    %1328 = vmatprep.subr.mxu0 0.0
    %1329 = vmatpush1.msra.mxu0 0.0
    %1330 = vmatprep.subr.mxu0 0.0
    %v1331 = vand.u32 %v1023, 4294901760
    %1332 = vmatpush1.msra.mxu0 %v1331
    %1333 = vmatprep.subr.mxu0 0.0
    %v1334 = vand.u32 %v1022, 4294901760
    %1335 = vmatpush1.msra.mxu0 %v1334
    %1336 = vmatprep.subr.mxu0 0.0
    %v1337 = vand.u32 %v1021, 4294901760
    %1338 = vmatpush1.msra.mxu0 %v1337
    %1339 = vmatprep.subr.mxu0 0.0
    %v1340 = vand.u32 %v1020, 4294901760
    %1341 = vmatpush1.msra.mxu0 %v1340
    %1342 = vmatprep.subr.mxu0 0.0
    %v1343 = vand.u32 %v1019, 4294901760
    %1344 = vmatpush1.msra.mxu0 %v1343
    %1345 = vmatprep.subr.mxu0 0.0
    %v1346 = vand.u32 %v1018, 4294901760
    %1347 = vmatpush1.msra.mxu0 %v1346
    %1348 = vmatprep.subr.mxu0 0.0
    %v1349 = vand.u32 %v1017, 4294901760
    %1350 = vmatpush1.msra.mxu0 %v1349
    %1351 = vmatprep.subr.mxu0 0.0
    %v1352 = vand.u32 %v1016, 4294901760
    %1353 = vmatpush1.msra.mxu0 %v1352
    %1354 = vmatprep.subr.mxu0 0.0
    %1355 = vmatpush2.msra.mxu0 0.0
    %1356 = vmatprep.subr.mxu0 0.0
    %1357 = vmatpush2.msra.mxu0 0.0
    %1358 = vmatprep.subr.mxu0 0.0
    %1359 = vmatpush2.msra.mxu0 0.0
    %1360 = vmatprep.subr.mxu0 0.0
    %1361 = vmatpush2.msra.mxu0 0.0
    %1362 = vmatprep.subr.mxu0 0.0
    %1363 = vmatpush2.msra.mxu0 0.0
    %1364 = vmatprep.subr.mxu0 0.0
    %1365 = vmatpush2.msra.mxu0 0.0
    %1366 = vmatprep.subr.mxu0 0.0
    %1367 = vmatpush2.msra.mxu0 0.0
    %1368 = vmatprep.subr.mxu0 0.0
    %1369 = vmatpush2.msra.mxu0 0.0
    %1370 = vmatprep.subr.mxu0 0.0
    %1371 = vmatpush2.msra.mxu0 0.0
    %1372 = vmatprep.subr.mxu0 0.0
    %1373 = vmatpush2.msra.mxu0 0.0
    %1374 = vmatprep.subr.mxu0 0.0
    %1375 = vmatpush2.msra.mxu0 0.0
    %1376 = vmatprep.subr.mxu0 0.0
    %1377 = vmatpush2.msra.mxu0 0.0
    %1378 = vmatprep.subr.mxu0 0.0
    %1379 = vmatpush2.msra.mxu0 0.0
    %1380 = vmatprep.subr.mxu0 0.0
    %1381 = vmatpush2.msra.mxu0 0.0
    %1382 = vmatprep.subr.mxu0 0.0
    %1383 = vmatpush2.msra.mxu0 0.0
    %1384 = vmatprep.subr.mxu0 0.0
    %1385 = vmatpush2.msra.mxu0 0.0
    %1386 = vmatprep.mubr.f32.mxu0 0.0
    %v1387 = vand.u32 %v1030, 4294901760
    %v1388 = vsub.f32 %v1030, %v1387
    %v1389 = vand.u32 %v1388, 4294901760
    %1390 = vmatmul.mubr.f32.gmra.mxu0 %v1389
    %v1391 = vpop.f32.mrf.mxu0
    %v1392 = vadd.f32 %v1311, %v1391
    %v1393 = vpop.f32.mrf.mxu0
    %1394 = vdwg.mxu0
    %1395 = vmatprep.subr.mxu0 0.0
    %1396 = vmatpush1.msra.mxu0 0.0
    %1397 = vmatprep.subr.mxu0 0.0
    %1398 = vmatpush1.msra.mxu0 0.0
    %1399 = vmatprep.subr.mxu0 0.0
    %1400 = vmatpush1.msra.mxu0 0.0
    %1401 = vmatprep.subr.mxu0 0.0
    %1402 = vmatpush1.msra.mxu0 0.0
    %1403 = vmatprep.subr.mxu0 0.0
    %1404 = vmatpush1.msra.mxu0 0.0
    %1405 = vmatprep.subr.mxu0 0.0
    %1406 = vmatpush1.msra.mxu0 0.0
    %1407 = vmatprep.subr.mxu0 0.0
    %1408 = vmatpush1.msra.mxu0 0.0
    %1409 = vmatprep.subr.mxu0 0.0
    %1410 = vmatpush1.msra.mxu0 0.0
    %1411 = vmatprep.subr.mxu0 0.0
    %v1412 = vand.u32 %v1023, 4294901760
    %v1413 = vsub.f32 %v1023, %v1412
    %v1414 = vand.u32 %v1413, 4294901760
    %1415 = vmatpush1.msra.mxu0 %v1414
    %1416 = vmatprep.subr.mxu0 0.0
    %v1417 = vand.u32 %v1022, 4294901760
    %v1418 = vsub.f32 %v1022, %v1417
    %v1419 = vand.u32 %v1418, 4294901760
    %1420 = vmatpush1.msra.mxu0 %v1419
    %1421 = vmatprep.subr.mxu0 0.0
    %v1422 = vand.u32 %v1021, 4294901760
    %v1423 = vsub.f32 %v1021, %v1422
    %v1424 = vand.u32 %v1423, 4294901760
    %1425 = vmatpush1.msra.mxu0 %v1424
    %1426 = vmatprep.subr.mxu0 0.0
    %v1427 = vand.u32 %v1020, 4294901760
    %v1428 = vsub.f32 %v1020, %v1427
    %v1429 = vand.u32 %v1428, 4294901760
    %1430 = vmatpush1.msra.mxu0 %v1429
    %1431 = vmatprep.subr.mxu0 0.0
    %v1432 = vand.u32 %v1019, 4294901760
    %v1433 = vsub.f32 %v1019, %v1432
    %v1434 = vand.u32 %v1433, 4294901760
    %1435 = vmatpush1.msra.mxu0 %v1434
    %1436 = vmatprep.subr.mxu0 0.0
    %v1437 = vand.u32 %v1018, 4294901760
    %v1438 = vsub.f32 %v1018, %v1437
    %v1439 = vand.u32 %v1438, 4294901760
    %1440 = vmatpush1.msra.mxu0 %v1439
    %1441 = vmatprep.subr.mxu0 0.0
    %v1442 = vand.u32 %v1017, 4294901760
    %v1443 = vsub.f32 %v1017, %v1442
    %v1444 = vand.u32 %v1443, 4294901760
    %1445 = vmatpush1.msra.mxu0 %v1444
    %1446 = vmatprep.subr.mxu0 0.0
    %v1447 = vand.u32 %v1016, 4294901760
    %v1448 = vsub.f32 %v1016, %v1447
    %v1449 = vand.u32 %v1448, 4294901760
    %1450 = vmatpush1.msra.mxu0 %v1449
    %1451 = vmatprep.subr.mxu0 0.0
    %1452 = vmatpush2.msra.mxu0 0.0
    %1453 = vmatprep.subr.mxu0 0.0
    %1454 = vmatpush2.msra.mxu0 0.0
    %1455 = vmatprep.subr.mxu0 0.0
    %1456 = vmatpush2.msra.mxu0 0.0
    %1457 = vmatprep.subr.mxu0 0.0
    %1458 = vmatpush2.msra.mxu0 0.0
    %1459 = vmatprep.subr.mxu0 0.0
    %1460 = vmatpush2.msra.mxu0 0.0
    %1461 = vmatprep.subr.mxu0 0.0
    %1462 = vmatpush2.msra.mxu0 0.0
    %1463 = vmatprep.subr.mxu0 0.0
    %1464 = vmatpush2.msra.mxu0 0.0
    %1465 = vmatprep.subr.mxu0 0.0
    %1466 = vmatpush2.msra.mxu0 0.0
    %1467 = vmatprep.subr.mxu0 0.0
    %1468 = vmatpush2.msra.mxu0 0.0
    %1469 = vmatprep.subr.mxu0 0.0
    %1470 = vmatpush2.msra.mxu0 0.0
    %1471 = vmatprep.subr.mxu0 0.0
    %1472 = vmatpush2.msra.mxu0 0.0
    %1473 = vmatprep.subr.mxu0 0.0
    %1474 = vmatpush2.msra.mxu0 0.0
    %1475 = vmatprep.subr.mxu0 0.0
    %1476 = vmatpush2.msra.mxu0 0.0
    %1477 = vmatprep.subr.mxu0 0.0
    %1478 = vmatpush2.msra.mxu0 0.0
    %1479 = vmatprep.subr.mxu0 0.0
    %1480 = vmatpush2.msra.mxu0 0.0
    %1481 = vmatprep.subr.mxu0 0.0
    %1482 = vmatpush2.msra.mxu0 0.0
    %1483 = vmatprep.mubr.f32.mxu0 0.0
    %v1484 = vand.u32 %v1030, 4294901760
    %1485 = vmatmul.mubr.f32.gmra.mxu0 %v1484
    %v1486 = vpop.f32.mrf.mxu0
    %v1487 = vadd.f32 %v1392, %v1486
    %v1488 = vpop.f32.mrf.mxu0
    %1489 = vdwg.mxu0
    %1490 = vmatprep.subr.mxu0 0.0
    %1491 = vmatpush1.msra.mxu0 0.0
    %1492 = vmatprep.subr.mxu0 0.0
    %1493 = vmatpush1.msra.mxu0 0.0
    %1494 = vmatprep.subr.mxu0 0.0
    %1495 = vmatpush1.msra.mxu0 0.0
    %1496 = vmatprep.subr.mxu0 0.0
    %1497 = vmatpush1.msra.mxu0 0.0
    %1498 = vmatprep.subr.mxu0 0.0
    %1499 = vmatpush1.msra.mxu0 0.0
    %1500 = vmatprep.subr.mxu0 0.0
    %1501 = vmatpush1.msra.mxu0 0.0
    %1502 = vmatprep.subr.mxu0 0.0
    %1503 = vmatpush1.msra.mxu0 0.0
    %1504 = vmatprep.subr.mxu0 0.0
    %1505 = vmatpush1.msra.mxu0 0.0
    %1506 = vmatprep.subr.mxu0 0.0
    %v1507 = vand.u32 %v1023, 4294901760
    %1508 = vmatpush1.msra.mxu0 %v1507
    %1509 = vmatprep.subr.mxu0 0.0
    %v1510 = vand.u32 %v1022, 4294901760
    %1511 = vmatpush1.msra.mxu0 %v1510
    %1512 = vmatprep.subr.mxu0 0.0
    %v1513 = vand.u32 %v1021, 4294901760
    %1514 = vmatpush1.msra.mxu0 %v1513
    %1515 = vmatprep.subr.mxu0 0.0
    %v1516 = vand.u32 %v1020, 4294901760
    %1517 = vmatpush1.msra.mxu0 %v1516
    %1518 = vmatprep.subr.mxu0 0.0
    %v1519 = vand.u32 %v1019, 4294901760
    %1520 = vmatpush1.msra.mxu0 %v1519
    %1521 = vmatprep.subr.mxu0 0.0
    %v1522 = vand.u32 %v1018, 4294901760
    %1523 = vmatpush1.msra.mxu0 %v1522
    %1524 = vmatprep.subr.mxu0 0.0
    %v1525 = vand.u32 %v1017, 4294901760
    %1526 = vmatpush1.msra.mxu0 %v1525
    %1527 = vmatprep.subr.mxu0 0.0
    %v1528 = vand.u32 %v1016, 4294901760
    %1529 = vmatpush1.msra.mxu0 %v1528
    %1530 = vmatprep.subr.mxu0 0.0
    %1531 = vmatpush2.msra.mxu0 0.0
    %1532 = vmatprep.subr.mxu0 0.0
    %1533 = vmatpush2.msra.mxu0 0.0
    %1534 = vmatprep.subr.mxu0 0.0
    %1535 = vmatpush2.msra.mxu0 0.0
    %1536 = vmatprep.subr.mxu0 0.0
    %1537 = vmatpush2.msra.mxu0 0.0
    %1538 = vmatprep.subr.mxu0 0.0
    %1539 = vmatpush2.msra.mxu0 0.0
    %1540 = vmatprep.subr.mxu0 0.0
    %1541 = vmatpush2.msra.mxu0 0.0
    %1542 = vmatprep.subr.mxu0 0.0
    %1543 = vmatpush2.msra.mxu0 0.0
    %1544 = vmatprep.subr.mxu0 0.0
    %1545 = vmatpush2.msra.mxu0 0.0
    %1546 = vmatprep.subr.mxu0 0.0
    %1547 = vmatpush2.msra.mxu0 0.0
    %1548 = vmatprep.subr.mxu0 0.0
    %1549 = vmatpush2.msra.mxu0 0.0
    %1550 = vmatprep.subr.mxu0 0.0
    %1551 = vmatpush2.msra.mxu0 0.0
    %1552 = vmatprep.subr.mxu0 0.0
    %1553 = vmatpush2.msra.mxu0 0.0
    %1554 = vmatprep.subr.mxu0 0.0
    %1555 = vmatpush2.msra.mxu0 0.0
    %1556 = vmatprep.subr.mxu0 0.0
    %1557 = vmatpush2.msra.mxu0 0.0
    %1558 = vmatprep.subr.mxu0 0.0
    %1559 = vmatpush2.msra.mxu0 0.0
    %1560 = vmatprep.subr.mxu0 0.0
    %1561 = vmatpush2.msra.mxu0 0.0
    %1562 = vmatprep.mubr.f32.mxu0 0.0
    %v1563 = vand.u32 %v1030, 4294901760
    %1564 = vmatmul.mubr.f32.gmra.mxu0 %v1563
    %v1565 = vpop.f32.mrf.mxu0
    %v1566 = vadd.f32 %v1487, %v1565
    %v1567 = vpop.f32.mrf.mxu0
    %1568 = vdwg.mxu0
    %vm1569 = vcmask 1041408
    %v1570 = vsel %vm1569, %v1566, -inf
    %v1571 = vrot.slane %v1570, 4
    %v1572 = vmax.f32 %v1570, %v1571
    %v1573 = vrot.slane %v1572, 2
    %v1574 = vmax.f32 %v1572, %v1573
    %v1575 = vrot.slane %v1574, 1
    %v1576 = vmax.f32 %v1574, %v1575
    %v1577 = vsub.f32 %v1566, %v1576
    %v1578 = vmul.f32 %v1577, 1.442695
    %v1579 = vpow.pop %v1578
    %v1580 = vsel %vm1569, %v1579, 0.0
    %v1581 = vrot.slane %v1580, 4
    %v1582 = vadd.f32 %v1580, %v1581
    %v1583 = vrot.slane %v1582, 2
    %v1584 = vadd.f32 %v1582, %v1583
    %v1585 = vrot.slane %v1584, 1
    %v1586 = vadd.f32 %v1584, %v1585
    %v1587 = vlog2.pop %v1586
    %v1588 = vmul.f32 %v1587, 0.6931472
    %v1589 = vsub.f32 %v1577, %v1588
    %v1590 = vmax.f32 %v1566, 0.0
    %v1591 = vld [vmem:[#allocation4 + $0x68] sm:$0xff]
    %v1592 = vld [vmem:[#allocation4 + $0x70] sm:$0xff]
    %v1593 = vld [vmem:[#allocation4 + $0x78] sm:$0xff]
    %v1594 = vld [vmem:[#allocation4 + $0x80] sm:$0xff]
    %v1595 = vlaneseq
    %v1596 = vshrl.u32 %v1595, 7
    %v1597 = vsub.s32 3, %v1596
    %v1598 = vrot.slane %v57, %v1597
    %v1600 = vsel %vm526, %v1590, 0
    %1602 = vmatprep.subr.mxu0 0.0
    %1603 = vmatpush1.msra.mxu0 0.0
    %1604 = vmatprep.subr.mxu0 0.0
    %1605 = vmatpush1.msra.mxu0 0.0
    %1606 = vmatprep.subr.mxu0 0.0
    %1607 = vmatpush1.msra.mxu0 0.0
    %1608 = vmatprep.subr.mxu0 0.0
    %1609 = vmatpush1.msra.mxu0 0.0
    %1610 = vmatprep.subr.mxu0 0.0
    %1611 = vmatpush1.msra.mxu0 0.0
    %1612 = vmatprep.subr.mxu0 0.0
    %1613 = vmatpush1.msra.mxu0 0.0
    %1614 = vmatprep.subr.mxu0 0.0
    %1615 = vmatpush1.msra.mxu0 0.0
    %1616 = vmatprep.subr.mxu0 0.0
    %1617 = vmatpush1.msra.mxu0 0.0
    %1618 = vmatprep.subr.mxu0 0.0
    %1619 = vmatpush1.msra.mxu0 0.0
    %1620 = vmatprep.subr.mxu0 0.0
    %1621 = vmatpush1.msra.mxu0 0.0
    %1622 = vmatprep.subr.mxu0 0.0
    %1623 = vmatpush1.msra.mxu0 0.0
    %1624 = vmatprep.subr.mxu0 0.0
    %1625 = vmatpush1.msra.mxu0 0.0
    %1626 = vmatprep.subr.mxu0 0.0
    %v1627 = vand.u32 %v1594, 4294901760
    %1628 = vmatpush1.msra.mxu0 %v1627
    %1629 = vmatprep.subr.mxu0 0.0
    %v1630 = vand.u32 %v1593, 4294901760
    %1631 = vmatpush1.msra.mxu0 %v1630
    %1632 = vmatprep.subr.mxu0 0.0
    %v1633 = vand.u32 %v1592, 4294901760
    %1634 = vmatpush1.msra.mxu0 %v1633
    %1635 = vmatprep.subr.mxu0 0.0
    %v1636 = vand.u32 %v1591, 4294901760
    %1637 = vmatpush1.msra.mxu0 %v1636
    %1638 = vmatprep.subr.mxu0 0.0
    %1639 = vmatpush2.msra.mxu0 0.0
    %1640 = vmatprep.subr.mxu0 0.0
    %1641 = vmatpush2.msra.mxu0 0.0
    %1642 = vmatprep.subr.mxu0 0.0
    %1643 = vmatpush2.msra.mxu0 0.0
    %1644 = vmatprep.subr.mxu0 0.0
    %1645 = vmatpush2.msra.mxu0 0.0
    %1646 = vmatprep.subr.mxu0 0.0
    %1647 = vmatpush2.msra.mxu0 0.0
    %1648 = vmatprep.subr.mxu0 0.0
    %1649 = vmatpush2.msra.mxu0 0.0
    %1650 = vmatprep.subr.mxu0 0.0
    %1651 = vmatpush2.msra.mxu0 0.0
    %1652 = vmatprep.subr.mxu0 0.0
    %1653 = vmatpush2.msra.mxu0 0.0
    %1654 = vmatprep.subr.mxu0 0.0
    %1655 = vmatpush2.msra.mxu0 0.0
    %1656 = vmatprep.subr.mxu0 0.0
    %1657 = vmatpush2.msra.mxu0 0.0
    %1658 = vmatprep.subr.mxu0 0.0
    %1659 = vmatpush2.msra.mxu0 0.0
    %1660 = vmatprep.subr.mxu0 0.0
    %1661 = vmatpush2.msra.mxu0 0.0
    %1662 = vmatprep.subr.mxu0 0.0
    %1663 = vmatpush2.msra.mxu0 0.0
    %1664 = vmatprep.subr.mxu0 0.0
    %1665 = vmatpush2.msra.mxu0 0.0
    %1666 = vmatprep.subr.mxu0 0.0
    %1667 = vmatpush2.msra.mxu0 0.0
    %1668 = vmatprep.subr.mxu0 0.0
    %1669 = vmatpush2.msra.mxu0 0.0
    %1670 = vmatprep.mubr.f32.mxu0 0.0
    %v1671 = vand.u32 %v1600, 4294901760
    %v1672 = vsub.f32 %v1600, %v1671
    %v1673 = vand.u32 %v1672, 4294901760
    %v1674 = vsub.f32 %v1672, %v1673
    %v1675 = vand.u32 %v1674, 4294901760
    %1676 = vmatmul.mubr.f32.gmra.mxu0 %v1675
    %v1677 = vpop.f32.mrf.mxu0
    %v1678 = vadd.f32 %v1598, %v1677
    %v1679 = vpop.f32.mrf.mxu0
    %1680 = vdwg.mxu0
    %1681 = vmatprep.subr.mxu0 0.0
    %1682 = vmatpush1.msra.mxu0 0.0
    %1683 = vmatprep.subr.mxu0 0.0
    %1684 = vmatpush1.msra.mxu0 0.0
    %1685 = vmatprep.subr.mxu0 0.0
    %1686 = vmatpush1.msra.mxu0 0.0
    %1687 = vmatprep.subr.mxu0 0.0
    %1688 = vmatpush1.msra.mxu0 0.0
    %1689 = vmatprep.subr.mxu0 0.0
    %1690 = vmatpush1.msra.mxu0 0.0
    %1691 = vmatprep.subr.mxu0 0.0
    %1692 = vmatpush1.msra.mxu0 0.0
    %1693 = vmatprep.subr.mxu0 0.0
    %1694 = vmatpush1.msra.mxu0 0.0
    %1695 = vmatprep.subr.mxu0 0.0
    %1696 = vmatpush1.msra.mxu0 0.0
    %1697 = vmatprep.subr.mxu0 0.0
    %1698 = vmatpush1.msra.mxu0 0.0
    %1699 = vmatprep.subr.mxu0 0.0
    %1700 = vmatpush1.msra.mxu0 0.0
    %1701 = vmatprep.subr.mxu0 0.0
    %1702 = vmatpush1.msra.mxu0 0.0
    %1703 = vmatprep.subr.mxu0 0.0
    %1704 = vmatpush1.msra.mxu0 0.0
    %1705 = vmatprep.subr.mxu0 0.0
    %v1706 = vand.u32 %v1594, 4294901760
    %v1707 = vsub.f32 %v1594, %v1706
    %v1708 = vand.u32 %v1707, 4294901760
    %v1709 = vsub.f32 %v1707, %v1708
    %v1710 = vand.u32 %v1709, 4294901760
    %1711 = vmatpush1.msra.mxu0 %v1710
    %1712 = vmatprep.subr.mxu0 0.0
    %v1713 = vand.u32 %v1593, 4294901760
    %v1714 = vsub.f32 %v1593, %v1713
    %v1715 = vand.u32 %v1714, 4294901760
    %v1716 = vsub.f32 %v1714, %v1715
    %v1717 = vand.u32 %v1716, 4294901760
    %1718 = vmatpush1.msra.mxu0 %v1717
    %1719 = vmatprep.subr.mxu0 0.0
    %v1720 = vand.u32 %v1592, 4294901760
    %v1721 = vsub.f32 %v1592, %v1720
    %v1722 = vand.u32 %v1721, 4294901760
    %v1723 = vsub.f32 %v1721, %v1722
    %v1724 = vand.u32 %v1723, 4294901760
    %1725 = vmatpush1.msra.mxu0 %v1724
    %1726 = vmatprep.subr.mxu0 0.0
    %v1727 = vand.u32 %v1591, 4294901760
    %v1728 = vsub.f32 %v1591, %v1727
    %v1729 = vand.u32 %v1728, 4294901760
    %v1730 = vsub.f32 %v1728, %v1729
    %v1731 = vand.u32 %v1730, 4294901760
    %1732 = vmatpush1.msra.mxu0 %v1731
    %1733 = vmatprep.subr.mxu0 0.0
    %1734 = vmatpush2.msra.mxu0 0.0
    %1735 = vmatprep.subr.mxu0 0.0
    %1736 = vmatpush2.msra.mxu0 0.0
    %1737 = vmatprep.subr.mxu0 0.0
    %1738 = vmatpush2.msra.mxu0 0.0
    %1739 = vmatprep.subr.mxu0 0.0
    %1740 = vmatpush2.msra.mxu0 0.0
    %1741 = vmatprep.subr.mxu0 0.0
    %1742 = vmatpush2.msra.mxu0 0.0
    %1743 = vmatprep.subr.mxu0 0.0
    %1744 = vmatpush2.msra.mxu0 0.0
    %1745 = vmatprep.subr.mxu0 0.0
    %1746 = vmatpush2.msra.mxu0 0.0
    %1747 = vmatprep.subr.mxu0 0.0
    %1748 = vmatpush2.msra.mxu0 0.0
    %1749 = vmatprep.subr.mxu0 0.0
    %1750 = vmatpush2.msra.mxu0 0.0
    %1751 = vmatprep.subr.mxu0 0.0
    %1752 = vmatpush2.msra.mxu0 0.0
    %1753 = vmatprep.subr.mxu0 0.0
    %1754 = vmatpush2.msra.mxu0 0.0
    %1755 = vmatprep.subr.mxu0 0.0
    %1756 = vmatpush2.msra.mxu0 0.0
    %1757 = vmatprep.subr.mxu0 0.0
    %1758 = vmatpush2.msra.mxu0 0.0
    %1759 = vmatprep.subr.mxu0 0.0
    %1760 = vmatpush2.msra.mxu0 0.0
    %1761 = vmatprep.subr.mxu0 0.0
    %1762 = vmatpush2.msra.mxu0 0.0
    %1763 = vmatprep.subr.mxu0 0.0
    %1764 = vmatpush2.msra.mxu0 0.0
    %1765 = vmatprep.mubr.f32.mxu0 0.0
    %v1766 = vand.u32 %v1600, 4294901760
    %1767 = vmatmul.mubr.f32.gmra.mxu0 %v1766
    %v1768 = vpop.f32.mrf.mxu0
    %v1769 = vadd.f32 %v1678, %v1768
    %v1770 = vpop.f32.mrf.mxu0
    %1771 = vdwg.mxu0
    %1772 = vmatprep.subr.mxu0 0.0
    %1773 = vmatpush1.msra.mxu0 0.0
    %1774 = vmatprep.subr.mxu0 0.0
    %1775 = vmatpush1.msra.mxu0 0.0
    %1776 = vmatprep.subr.mxu0 0.0
    %1777 = vmatpush1.msra.mxu0 0.0
    %1778 = vmatprep.subr.mxu0 0.0
    %1779 = vmatpush1.msra.mxu0 0.0
    %1780 = vmatprep.subr.mxu0 0.0
    %1781 = vmatpush1.msra.mxu0 0.0
    %1782 = vmatprep.subr.mxu0 0.0
    %1783 = vmatpush1.msra.mxu0 0.0
    %1784 = vmatprep.subr.mxu0 0.0
    %1785 = vmatpush1.msra.mxu0 0.0
    %1786 = vmatprep.subr.mxu0 0.0
    %1787 = vmatpush1.msra.mxu0 0.0
    %1788 = vmatprep.subr.mxu0 0.0
    %1789 = vmatpush1.msra.mxu0 0.0
    %1790 = vmatprep.subr.mxu0 0.0
    %1791 = vmatpush1.msra.mxu0 0.0
    %1792 = vmatprep.subr.mxu0 0.0
    %1793 = vmatpush1.msra.mxu0 0.0
    %1794 = vmatprep.subr.mxu0 0.0
    %1795 = vmatpush1.msra.mxu0 0.0
    %1796 = vmatprep.subr.mxu0 0.0
    %v1797 = vand.u32 %v1594, 4294901760
    %v1798 = vsub.f32 %v1594, %v1797
    %1799 = vmatpush1.msra.mxu0 %v1798
    %1800 = vmatprep.subr.mxu0 0.0
    %v1801 = vand.u32 %v1593, 4294901760
    %v1802 = vsub.f32 %v1593, %v1801
    %1803 = vmatpush1.msra.mxu0 %v1802
    %1804 = vmatprep.subr.mxu0 0.0
    %v1805 = vand.u32 %v1592, 4294901760
    %v1806 = vsub.f32 %v1592, %v1805
    %1807 = vmatpush1.msra.mxu0 %v1806
    %1808 = vmatprep.subr.mxu0 0.0
    %v1809 = vand.u32 %v1591, 4294901760
    %v1810 = vsub.f32 %v1591, %v1809
    %1811 = vmatpush1.msra.mxu0 %v1810
    %1812 = vmatprep.subr.mxu0 0.0
    %1813 = vmatpush2.msra.mxu0 0.0
    %1814 = vmatprep.subr.mxu0 0.0
    %1815 = vmatpush2.msra.mxu0 0.0
    %1816 = vmatprep.subr.mxu0 0.0
    %1817 = vmatpush2.msra.mxu0 0.0
    %1818 = vmatprep.subr.mxu0 0.0
    %1819 = vmatpush2.msra.mxu0 0.0
    %1820 = vmatprep.subr.mxu0 0.0
    %1821 = vmatpush2.msra.mxu0 0.0
    %1822 = vmatprep.subr.mxu0 0.0
    %1823 = vmatpush2.msra.mxu0 0.0
    %1824 = vmatprep.subr.mxu0 0.0
    %1825 = vmatpush2.msra.mxu0 0.0
    %1826 = vmatprep.subr.mxu0 0.0
    %1827 = vmatpush2.msra.mxu0 0.0
    %1828 = vmatprep.subr.mxu0 0.0
    %1829 = vmatpush2.msra.mxu0 0.0
    %1830 = vmatprep.subr.mxu0 0.0
    %1831 = vmatpush2.msra.mxu0 0.0
    %1832 = vmatprep.subr.mxu0 0.0
    %1833 = vmatpush2.msra.mxu0 0.0
    %1834 = vmatprep.subr.mxu0 0.0
    %1835 = vmatpush2.msra.mxu0 0.0
    %1836 = vmatprep.subr.mxu0 0.0
    %1837 = vmatpush2.msra.mxu0 0.0
    %1838 = vmatprep.subr.mxu0 0.0
    %1839 = vmatpush2.msra.mxu0 0.0
    %1840 = vmatprep.subr.mxu0 0.0
    %1841 = vmatpush2.msra.mxu0 0.0
    %1842 = vmatprep.subr.mxu0 0.0
    %1843 = vmatpush2.msra.mxu0 0.0
    %1844 = vmatprep.mubr.f32.mxu0 0.0
    %v1845 = vand.u32 %v1600, 4294901760
    %v1846 = vsub.f32 %v1600, %v1845
    %1847 = vmatmul.mubr.f32.gmra.mxu0 %v1846
    %v1848 = vpop.f32.mrf.mxu0
    %v1849 = vadd.f32 %v1769, %v1848
    %v1850 = vpop.f32.mrf.mxu0
    %1851 = vdwg.mxu0
    %1852 = vmatprep.subr.mxu0 0.0
    %1853 = vmatpush1.msra.mxu0 0.0
    %1854 = vmatprep.subr.mxu0 0.0
    %1855 = vmatpush1.msra.mxu0 0.0
    %1856 = vmatprep.subr.mxu0 0.0
    %1857 = vmatpush1.msra.mxu0 0.0
    %1858 = vmatprep.subr.mxu0 0.0
    %1859 = vmatpush1.msra.mxu0 0.0
    %1860 = vmatprep.subr.mxu0 0.0
    %1861 = vmatpush1.msra.mxu0 0.0
    %1862 = vmatprep.subr.mxu0 0.0
    %1863 = vmatpush1.msra.mxu0 0.0
    %1864 = vmatprep.subr.mxu0 0.0
    %1865 = vmatpush1.msra.mxu0 0.0
    %1866 = vmatprep.subr.mxu0 0.0
    %1867 = vmatpush1.msra.mxu0 0.0
    %1868 = vmatprep.subr.mxu0 0.0
    %1869 = vmatpush1.msra.mxu0 0.0
    %1870 = vmatprep.subr.mxu0 0.0
    %1871 = vmatpush1.msra.mxu0 0.0
    %1872 = vmatprep.subr.mxu0 0.0
    %1873 = vmatpush1.msra.mxu0 0.0
    %1874 = vmatprep.subr.mxu0 0.0
    %1875 = vmatpush1.msra.mxu0 0.0
    %1876 = vmatprep.subr.mxu0 0.0
    %v1877 = vand.u32 %v1594, 4294901760
    %1878 = vmatpush1.msra.mxu0 %v1877
    %1879 = vmatprep.subr.mxu0 0.0
    %v1880 = vand.u32 %v1593, 4294901760
    %1881 = vmatpush1.msra.mxu0 %v1880
    %1882 = vmatprep.subr.mxu0 0.0
    %v1883 = vand.u32 %v1592, 4294901760
    %1884 = vmatpush1.msra.mxu0 %v1883
    %1885 = vmatprep.subr.mxu0 0.0
    %v1886 = vand.u32 %v1591, 4294901760
    %1887 = vmatpush1.msra.mxu0 %v1886
    %1888 = vmatprep.subr.mxu0 0.0
    %1889 = vmatpush2.msra.mxu0 0.0
    %1890 = vmatprep.subr.mxu0 0.0
    %1891 = vmatpush2.msra.mxu0 0.0
    %1892 = vmatprep.subr.mxu0 0.0
    %1893 = vmatpush2.msra.mxu0 0.0
    %1894 = vmatprep.subr.mxu0 0.0
    %1895 = vmatpush2.msra.mxu0 0.0
    %1896 = vmatprep.subr.mxu0 0.0
    %1897 = vmatpush2.msra.mxu0 0.0
    %1898 = vmatprep.subr.mxu0 0.0
    %1899 = vmatpush2.msra.mxu0 0.0
    %1900 = vmatprep.subr.mxu0 0.0
    %1901 = vmatpush2.msra.mxu0 0.0
    %1902 = vmatprep.subr.mxu0 0.0
    %1903 = vmatpush2.msra.mxu0 0.0
    %1904 = vmatprep.subr.mxu0 0.0
    %1905 = vmatpush2.msra.mxu0 0.0
    %1906 = vmatprep.subr.mxu0 0.0
    %1907 = vmatpush2.msra.mxu0 0.0
    %1908 = vmatprep.subr.mxu0 0.0
    %1909 = vmatpush2.msra.mxu0 0.0
    %1910 = vmatprep.subr.mxu0 0.0
    %1911 = vmatpush2.msra.mxu0 0.0
    %1912 = vmatprep.subr.mxu0 0.0
    %1913 = vmatpush2.msra.mxu0 0.0
    %1914 = vmatprep.subr.mxu0 0.0
    %1915 = vmatpush2.msra.mxu0 0.0
    %1916 = vmatprep.subr.mxu0 0.0
    %1917 = vmatpush2.msra.mxu0 0.0
    %1918 = vmatprep.subr.mxu0 0.0
    %1919 = vmatpush2.msra.mxu0 0.0
    %1920 = vmatprep.mubr.f32.mxu0 0.0
    %v1921 = vand.u32 %v1600, 4294901760
    %v1922 = vsub.f32 %v1600, %v1921
    %v1923 = vand.u32 %v1922, 4294901760
    %1924 = vmatmul.mubr.f32.gmra.mxu0 %v1923
    %v1925 = vpop.f32.mrf.mxu0
    %v1926 = vadd.f32 %v1849, %v1925
    %v1927 = vpop.f32.mrf.mxu0
    %1928 = vdwg.mxu0
    %1929 = vmatprep.subr.mxu0 0.0
    %1930 = vmatpush1.msra.mxu0 0.0
    %1931 = vmatprep.subr.mxu0 0.0
    %1932 = vmatpush1.msra.mxu0 0.0
    %1933 = vmatprep.subr.mxu0 0.0
    %1934 = vmatpush1.msra.mxu0 0.0
    %1935 = vmatprep.subr.mxu0 0.0
    %1936 = vmatpush1.msra.mxu0 0.0
    %1937 = vmatprep.subr.mxu0 0.0
    %1938 = vmatpush1.msra.mxu0 0.0
    %1939 = vmatprep.subr.mxu0 0.0
    %1940 = vmatpush1.msra.mxu0 0.0
    %1941 = vmatprep.subr.mxu0 0.0
    %1942 = vmatpush1.msra.mxu0 0.0
    %1943 = vmatprep.subr.mxu0 0.0
    %1944 = vmatpush1.msra.mxu0 0.0
    %1945 = vmatprep.subr.mxu0 0.0
    %1946 = vmatpush1.msra.mxu0 0.0
    %1947 = vmatprep.subr.mxu0 0.0
    %1948 = vmatpush1.msra.mxu0 0.0
    %1949 = vmatprep.subr.mxu0 0.0
    %1950 = vmatpush1.msra.mxu0 0.0
    %1951 = vmatprep.subr.mxu0 0.0
    %1952 = vmatpush1.msra.mxu0 0.0
    %1953 = vmatprep.subr.mxu0 0.0
    %v1954 = vand.u32 %v1594, 4294901760
    %v1955 = vsub.f32 %v1594, %v1954
    %v1956 = vand.u32 %v1955, 4294901760
    %1957 = vmatpush1.msra.mxu0 %v1956
    %1958 = vmatprep.subr.mxu0 0.0
    %v1959 = vand.u32 %v1593, 4294901760
    %v1960 = vsub.f32 %v1593, %v1959
    %v1961 = vand.u32 %v1960, 4294901760
    %1962 = vmatpush1.msra.mxu0 %v1961
    %1963 = vmatprep.subr.mxu0 0.0
    %v1964 = vand.u32 %v1592, 4294901760
    %v1965 = vsub.f32 %v1592, %v1964
    %v1966 = vand.u32 %v1965, 4294901760
    %1967 = vmatpush1.msra.mxu0 %v1966
    %1968 = vmatprep.subr.mxu0 0.0
    %v1969 = vand.u32 %v1591, 4294901760
    %v1970 = vsub.f32 %v1591, %v1969
    %v1971 = vand.u32 %v1970, 4294901760
    %1972 = vmatpush1.msra.mxu0 %v1971
    %1973 = vmatprep.subr.mxu0 0.0
    %1974 = vmatpush2.msra.mxu0 0.0
    %1975 = vmatprep.subr.mxu0 0.0
    %1976 = vmatpush2.msra.mxu0 0.0
    %1977 = vmatprep.subr.mxu0 0.0
    %1978 = vmatpush2.msra.mxu0 0.0
    %1979 = vmatprep.subr.mxu0 0.0
    %1980 = vmatpush2.msra.mxu0 0.0
    %1981 = vmatprep.subr.mxu0 0.0
    %1982 = vmatpush2.msra.mxu0 0.0
    %1983 = vmatprep.subr.mxu0 0.0
    %1984 = vmatpush2.msra.mxu0 0.0
    %1985 = vmatprep.subr.mxu0 0.0
    %1986 = vmatpush2.msra.mxu0 0.0
    %1987 = vmatprep.subr.mxu0 0.0
    %1988 = vmatpush2.msra.mxu0 0.0
    %1989 = vmatprep.subr.mxu0 0.0
    %1990 = vmatpush2.msra.mxu0 0.0
    %1991 = vmatprep.subr.mxu0 0.0
    %1992 = vmatpush2.msra.mxu0 0.0
    %1993 = vmatprep.subr.mxu0 0.0
    %1994 = vmatpush2.msra.mxu0 0.0
    %1995 = vmatprep.subr.mxu0 0.0
    %1996 = vmatpush2.msra.mxu0 0.0
    %1997 = vmatprep.subr.mxu0 0.0
    %1998 = vmatpush2.msra.mxu0 0.0
    %1999 = vmatprep.subr.mxu0 0.0
    %2000 = vmatpush2.msra.mxu0 0.0
    %2001 = vmatprep.subr.mxu0 0.0
    %2002 = vmatpush2.msra.mxu0 0.0
    %2003 = vmatprep.subr.mxu0 0.0
    %2004 = vmatpush2.msra.mxu0 0.0
    %2005 = vmatprep.mubr.f32.mxu0 0.0
    %v2006 = vand.u32 %v1600, 4294901760
    %2007 = vmatmul.mubr.f32.gmra.mxu0 %v2006
    %v2008 = vpop.f32.mrf.mxu0
    %v2009 = vadd.f32 %v1926, %v2008
    %v2010 = vpop.f32.mrf.mxu0
    %2011 = vdwg.mxu0
    %2012 = vmatprep.subr.mxu0 0.0
    %2013 = vmatpush1.msra.mxu0 0.0
    %2014 = vmatprep.subr.mxu0 0.0
    %2015 = vmatpush1.msra.mxu0 0.0
    %2016 = vmatprep.subr.mxu0 0.0
    %2017 = vmatpush1.msra.mxu0 0.0
    %2018 = vmatprep.subr.mxu0 0.0
    %2019 = vmatpush1.msra.mxu0 0.0
    %2020 = vmatprep.subr.mxu0 0.0
    %2021 = vmatpush1.msra.mxu0 0.0
    %2022 = vmatprep.subr.mxu0 0.0
    %2023 = vmatpush1.msra.mxu0 0.0
    %2024 = vmatprep.subr.mxu0 0.0
    %2025 = vmatpush1.msra.mxu0 0.0
    %2026 = vmatprep.subr.mxu0 0.0
    %2027 = vmatpush1.msra.mxu0 0.0
    %2028 = vmatprep.subr.mxu0 0.0
    %2029 = vmatpush1.msra.mxu0 0.0
    %2030 = vmatprep.subr.mxu0 0.0
    %2031 = vmatpush1.msra.mxu0 0.0
    %2032 = vmatprep.subr.mxu0 0.0
    %2033 = vmatpush1.msra.mxu0 0.0
    %2034 = vmatprep.subr.mxu0 0.0
    %2035 = vmatpush1.msra.mxu0 0.0
    %2036 = vmatprep.subr.mxu0 0.0
    %v2037 = vand.u32 %v1594, 4294901760
    %2038 = vmatpush1.msra.mxu0 %v2037
    %2039 = vmatprep.subr.mxu0 0.0
    %v2040 = vand.u32 %v1593, 4294901760
    %2041 = vmatpush1.msra.mxu0 %v2040
    %2042 = vmatprep.subr.mxu0 0.0
    %v2043 = vand.u32 %v1592, 4294901760
    %2044 = vmatpush1.msra.mxu0 %v2043
    %2045 = vmatprep.subr.mxu0 0.0
    %v2046 = vand.u32 %v1591, 4294901760
    %2047 = vmatpush1.msra.mxu0 %v2046
    %2048 = vmatprep.subr.mxu0 0.0
    %2049 = vmatpush2.msra.mxu0 0.0
    %2050 = vmatprep.subr.mxu0 0.0
    %2051 = vmatpush2.msra.mxu0 0.0
    %2052 = vmatprep.subr.mxu0 0.0
    %2053 = vmatpush2.msra.mxu0 0.0
    %2054 = vmatprep.subr.mxu0 0.0
    %2055 = vmatpush2.msra.mxu0 0.0
    %2056 = vmatprep.subr.mxu0 0.0
    %2057 = vmatpush2.msra.mxu0 0.0
    %2058 = vmatprep.subr.mxu0 0.0
    %2059 = vmatpush2.msra.mxu0 0.0
    %2060 = vmatprep.subr.mxu0 0.0
    %2061 = vmatpush2.msra.mxu0 0.0
    %2062 = vmatprep.subr.mxu0 0.0
    %2063 = vmatpush2.msra.mxu0 0.0
    %2064 = vmatprep.subr.mxu0 0.0
    %2065 = vmatpush2.msra.mxu0 0.0
    %2066 = vmatprep.subr.mxu0 0.0
    %2067 = vmatpush2.msra.mxu0 0.0
    %2068 = vmatprep.subr.mxu0 0.0
    %2069 = vmatpush2.msra.mxu0 0.0
    %2070 = vmatprep.subr.mxu0 0.0
    %2071 = vmatpush2.msra.mxu0 0.0
    %2072 = vmatprep.subr.mxu0 0.0
    %2073 = vmatpush2.msra.mxu0 0.0
    %2074 = vmatprep.subr.mxu0 0.0
    %2075 = vmatpush2.msra.mxu0 0.0
    %2076 = vmatprep.subr.mxu0 0.0
    %2077 = vmatpush2.msra.mxu0 0.0
    %2078 = vmatprep.subr.mxu0 0.0
    %2079 = vmatpush2.msra.mxu0 0.0
    %2080 = vmatprep.mubr.f32.mxu0 0.0
    %v2081 = vand.u32 %v1600, 4294901760
    %2082 = vmatmul.mubr.f32.gmra.mxu0 %v2081
    %v2083 = vpop.f32.mrf.mxu0
    %v2084 = vadd.f32 %v2009, %v2083
    %v2085 = vpop.f32.mrf.mxu0
    %2086 = vdwg.mxu0
    %v2087 = vtanh.pop %v2084
    %v2088 = vlaneseq
    %v2089 = vand.u32 %v2088, 127
    %vm2090 = vcmp.lt.s32.totalorder %v2089, 2
    %v2091 = vsel %vm2090, %v1589, %v2087
    %2092 = vst [vmem:[%s2] sm:$0x3] %v2091
    // Predicated region
    $region18: #{actor_critic_forward.1} parent=1 // pred_check
      _
    $region19: #{actor_critic_forward.1} parent=1 // pred_check_branch
      %2094 = sbr.rel (0) target = $region21
    $region20: #{actor_critic_forward.1} parent=1 // pred_region
      _
    $region21: #{actor_critic_forward.1} parent=1 // pred_fallthru
      _
    // Predicated region
    $region22: #{actor_critic_forward.1} parent=1 // pred_check
      _
    $region23: #{actor_critic_forward.1} parent=1 // pred_check_branch
      %2096 = sbr.rel (0) target = $region25
    $region24: #{actor_critic_forward.1} parent=1 // pred_region
      _
    $region25: #{actor_critic_forward.1} parent=1 // pred_fallthru
      _
    %2097 = vsyncpa [#allocation3], 1
    %2098 = vsyncpa [#allocation5], 1

</llo_original>
